<compile_context>
chip_gen: v6e
topology: v6e:2x2x1
jax: 0.10.0
libtpu: 0.0.40
codegen_flags: <defaults>
</compile_context>

<pallas_src>
import functools
import math

import jax
import jax.numpy as jnp
import numpy as np
from jax import lax
from jax.experimental import pallas as pl
from jax.experimental.pallas import tpu as pltpu

NEG = -1.0e12  # the "'-inf'" value used by sequence_masking


# --------------------------------------------------------------------------
# Pallas kernel: biaffine scoring + mask + tril
# grid = (batch, query-row tile); one (O, TQ, Lp) output slab per step.
# --------------------------------------------------------------------------
def _biaffine_kernel(start_ref, end_ref, w1_ref, w2s_ref, w2e_ref, w2b_ref,
                     mrow_ref, mcol_ref, out_ref, *, out_size, dp, tq):
    # start_ref / end_ref : (1, Lp, Dp)  bf16, full padded sequence
    # w1_ref              : (Dp, O*Dp)  bf16, weight1 pre-padded + flattened
    # w2s_ref / w2e_ref   : (Dp, O)     bf16, weight2 start / end halves
    # w2b_ref             : (1, O)      f32, weight2 bias row
    # mrow_ref            : (1, TQ, 1)  f32, row mask for this tile
    # mcol_ref            : (1, 1, Lp)  f32, column mask (full)
    # out_ref             : (1, O, TQ, Lp)
    f32 = jnp.float32
    q = pl.program_id(1)
    row0 = pl.multiple_of(q * tq, tq)

    s_full = start_ref[0]                          # (Lp, Dp)
    e_full = end_ref[0]                            # (Lp, Dp)
    s_tile = start_ref[0, pl.ds(row0, tq), :]      # (TQ, Dp)  start at rows x
    e_tile = end_ref[0, pl.ds(row0, tq), :]        # (TQ, Dp)  end   at rows x
    lp = e_full.shape[0]

    # ---- logits_2 rank-1 terms (computed once per tile) ----------------------
    # col_term_t[o, y] = start[y] . W2[:D1, o]
    col_term_t = lax.dot_general(w2s_ref[...], s_full,
                                 dimension_numbers=(((0,), (1,)), ((), ())),
                                 preferred_element_type=f32)            # (O, Lp)
    # row_term[x, o] = end[x] . W2[D1:2*D1, o] + W2[2*D1, o]
    row_term = jnp.dot(e_tile, w2e_ref[...], preferred_element_type=f32)  # (TQ, O)
    row_term = row_term + w2b_ref[...]                                    # (1, O) bcast

    # ---- logits_1 first contraction: one wide MXU matmul ---------------------
    # T[x, o*Dp + j] = sum_i start[x, i] * W1[i, o, j]
    t = jnp.dot(s_tile, w1_ref[...], preferred_element_type=f32)        # (TQ, O*Dp)
    t = t.astype(jnp.bfloat16)

    # ---- mask algebra hoisted out of the o-loop ------------------------------
    #   logits = (l1 + l2) * (mrow * mcol)
    #            + NEG*(1-mrow)*mcol + NEG*(1-mcol) - tril*1e12
    mrow = mrow_ref[0]                                                  # (TQ, 1)
    mcol = mcol_ref[0]                                                  # (1, Lp)
    ri = lax.broadcasted_iota(jnp.int32, (tq, lp), 0) + row0            # global row
    ci = lax.broadcasted_iota(jnp.int32, (tq, lp), 1)                   # global col
    tril = (ri > ci).astype(f32)
    mcomb = mrow * mcol                                                 # (TQ, Lp)
    badd = NEG * (1.0 - mrow) * mcol + NEG * (1.0 - mcol) - tril * 1.0e12

    for o in range(out_size):  # out_size is small & static -> unrolled
        t_o = t[:, o * dp:(o + 1) * dp]                                 # lane-aligned slice
        # l1[x, y] = sum_j T_o[x, j] * end[y, j]
        l1 = lax.dot_general(t_o, e_full,
                             dimension_numbers=(((1,), (1,)), ((), ())),
                             preferred_element_type=f32)                # (TQ, Lp)
        l2 = row_term[:, o:o + 1] + col_term_t[o:o + 1, :]              # (TQ, Lp)
        out_ref[0, o] = ((l1 + l2) * mcomb + badd).astype(out_ref.dtype)


def biaffine_pallas(start_logits, end_logits, weight1, weight2, mask, *, tq=128):
    """start/end: (B, L, D1) with bias column appended; returns (B, O, L, L)."""
    B, L, D1 = start_logits.shape
    O = weight1.shape[1]
    out_dtype = start_logits.dtype
    bf16, f32 = jnp.bfloat16, jnp.float32

    # Pad feature dim and sequence dim up to multiples of 128 (MXU / lane
    # alignment; padded rows/cols are sliced off the output at the end).
    Dp = pl.cdiv(D1, 128) * 128
    Lp = pl.cdiv(L, 128) * 128
    tq = min(tq, Lp)
    if Lp % tq != 0:
        tq = 128
    assert Lp % tq == 0

    start_p = jnp.pad(start_logits.astype(bf16), ((0, 0), (0, Lp - L), (0, Dp - D1)))
    end_p = jnp.pad(end_logits.astype(bf16), ((0, 0), (0, Lp - L), (0, Dp - D1)))

    # weight1 (D1, O, D1) -> padded, flattened to (Dp, O*Dp): first contraction
    # becomes one wide matmul; per-o access inside the kernel is a lane-aligned
    # static slice (no relayout).
    w1_p = jnp.pad(weight1.astype(bf16), ((0, Dp - D1), (0, 0), (0, Dp - D1)))
    w1_flat = w1_p.reshape(Dp, O * Dp)

    # weight2 split + padded so the kernel never slices at odd offsets.
    w2 = weight2
    w2s = jnp.pad(w2[:D1].astype(bf16), ((0, Dp - D1), (0, 0)))         # (Dp, O)
    w2e = jnp.pad(w2[D1:2 * D1].astype(bf16), ((0, Dp - D1), (0, 0)))   # (Dp, O)
    w2b = w2[2 * D1:2 * D1 + 1].astype(f32)                             # (1, O)

    m = jnp.pad(mask.astype(f32), ((0, 0), (0, Lp - L)))                # (B, Lp)
    mrow = m[:, :, None]                                                # (B, Lp, 1)
    mcol = m[:, None, :]                                                # (B, 1, Lp)

    grid = (B, Lp // tq)
    kernel = functools.partial(_biaffine_kernel, out_size=O, dp=Dp, tq=tq)

    # Advisory cost estimate so XLA overlaps the surrounding LSTM / projections.
    flops = int(2 * B * Lp * O * Dp * (Dp + Lp + 2))
    bytes_accessed = int(
        (start_p.size + end_p.size + w1_flat.size + w2s.size + w2e.size) * 2
        + (w2b.size + mrow.size + mcol.size) * 4 + B * O * Lp * Lp * 4)

    # Explicit scoped-VMEM budget (double-buffered pipeline blocks + temps);
    # matters most on v7x (64 MiB physical VMEM).
    step_bytes = (2 * (2 * Lp * Dp * 2)            # start/end blocks (bf16)
                  + 2 * (Dp * O * Dp * 2)          # w1_flat
                  + 2 * (2 * Dp * O * 2 + O * 4)   # w2 pieces
                  + 2 * (tq * 4 + Lp * 4)          # masks
                  + 2 * (O * tq * Lp * 4)          # output block
                  + tq * O * Dp * 6                # T (f32 + bf16 copy)
                  + 8 * tq * Lp * 4)               # per-o temporaries / mask algebra
    vmem_limit = int(min(max(step_bytes + (8 << 20), 32 << 20), 100 << 20))
    # NOTE: constant-index weight blocks could additionally use
    # pipeline_mode=pl.Buffered(1) to skip double buffering on v7x.

    out = pl.pallas_call(
        kernel,
        out_shape=jax.ShapeDtypeStruct((B, O, Lp, Lp), out_dtype),
        grid_spec=pltpu.PrefetchScalarGridSpec(
            num_scalar_prefetch=0,
            grid=grid,
            in_specs=[
                pl.BlockSpec((1, Lp, Dp), lambda b, q: (b, 0, 0)),    # start (full)
                pl.BlockSpec((1, Lp, Dp), lambda b, q: (b, 0, 0)),    # end   (full)
                pl.BlockSpec((Dp, O * Dp), lambda b, q: (0, 0)),      # weight1 flat
                pl.BlockSpec((Dp, O), lambda b, q: (0, 0)),           # weight2[:D1]
                pl.BlockSpec((Dp, O), lambda b, q: (0, 0)),           # weight2[D1:2D1]
                pl.BlockSpec((1, O), lambda b, q: (0, 0)),            # weight2 bias row
                pl.BlockSpec((1, tq, 1), lambda b, q: (b, q, 0)),     # row mask (tile)
                pl.BlockSpec((1, 1, Lp), lambda b, q: (b, 0, 0)),     # col mask (full)
            ],
            out_specs=pl.BlockSpec((1, O, tq, Lp), lambda b, q: (b, 0, q, 0)),
        ),
        compiler_params=pltpu.CompilerParams(
            dimension_semantics=("parallel", "parallel"),
            vmem_limit_bytes=vmem_limit),
        cost_estimate=pl.CostEstimate(
            flops=flops, transcendentals=0, bytes_accessed=bytes_accessed),
    )(start_p, end_p, w1_flat, w2s, w2e, w2b, mrow, mcol)

    return out[:, :, :L, :L]


# --------------------------------------------------------------------------
# Plain-JAX glue reproducing the upstream parts of Biaffine.forward
# --------------------------------------------------------------------------
def sinusoidal_position_embedding(batch, seq_len, dim, dtype):
    pos = jnp.arange(seq_len, dtype=jnp.float32)[None]          # (1, L)
    idx = jnp.arange(dim // 2, dtype=jnp.float32)
    idx = jnp.power(10000.0, -2.0 * idx / dim)
    emb = jnp.einsum('bn,d->bnd', pos, idx)                      # (1, L, dim/2)
    emb = jnp.stack([jnp.sin(emb), jnp.cos(emb)], axis=-1)
    emb = jnp.reshape(emb, (-1, seq_len, dim))
    return emb.astype(dtype)


# TODO(synk): the bidirectional LSTM recurrence is inherently sequential and has no
# clean Pallas tiling; it is kept as plain-JAX lax.scan glue (PyTorch gate order i,f,g,o).
def _lstm_one_direction(x, w_ih, w_hh, b_ih, b_hh):
    B = x.shape[0]
    H = w_hh.shape[1]

    def step(carry, xt):
        h, c = carry
        gates = xt @ w_ih.T + h @ w_hh.T + b_ih + b_hh
        i, f, g, o = jnp.split(gates, 4, axis=-1)
        i = jax.nn.sigmoid(i)
        f = jax.nn.sigmoid(f)
        g = jnp.tanh(g)
        o = jax.nn.sigmoid(o)
        c = f * c + i * g
        h = o * jnp.tanh(c)
        return (h, c), h

    h0 = jnp.zeros((B, H), x.dtype)
    (_, _), hs = lax.scan(step, (h0, h0), jnp.swapaxes(x, 0, 1))
    return jnp.swapaxes(hs, 0, 1)                                # (B, L, H)


def lstm_bidirectional(x, p):
    fwd = _lstm_one_direction(x, p['w_ih_f'], p['w_hh_f'], p['b_ih_f'], p['b_hh_f'])
    bwd = _lstm_one_direction(x[:, ::-1, :], p['w_ih_b'], p['w_hh_b'],
                              p['b_ih_b'], p['b_hh_b'])[:, ::-1, :]
    return jnp.concatenate([fwd, bwd], axis=-1)                  # (B, L, 2*dim_in)


def prepare_start_end(inputs, params, ab_position=False):
    B, L, H = inputs.shape
    if ab_position:
        inputs = inputs + sinusoidal_position_embedding(B, L, H, inputs.dtype)
    enc = lstm_bidirectional(inputs, params['lstm'])
    start = jax.nn.relu(enc @ params['w_start'].T + params['b_start'])
    end = jax.nn.relu(enc @ params['w_end'].T + params['b_end'])
    ones = jnp.ones(start.shape[:-1] + (1,), start.dtype)
    start = jnp.concatenate([start, ones], axis=-1)              # bias_x
    end = jnp.concatenate([end, ones], axis=-1)                  # bias_y
    return start, end


def biaffine_forward(inputs, mask, params, ab_position=False):
    start, end = prepare_start_end(inputs, params, ab_position)
    return biaffine_pallas(start, end, params['weight1'], params['weight2'], mask)


# --------------------------------------------------------------------------
# Pure-JAX reference (mirrors the PyTorch einsums) for a correctness check
# --------------------------------------------------------------------------
def biaffine_reference(start, end, w1, w2, mask):
    B, L, D1 = start.shape
    hp = lax.Precision.HIGHEST
    l1 = jnp.einsum('bxi,ioj,byj->bxyo', start, w1, end, precision=hp)
    start_con = jnp.broadcast_to(start[:, None, :, :], (B, L, L, D1))
    end_con = jnp.broadcast_to(end[:, :, None, :], (B, L, L, D1))
    concat = jnp.concatenate(
        [start_con, end_con, jnp.ones((B, L, L, 1), start.dtype)], axis=-1)
    l2 = jnp.einsum('bijy,yo->bijo', concat, w2, precision=hp)
    logits = jnp.transpose(l1 + l2, (0, 3, 1, 2))                # (B, O, L, L)
    m = mask.astype(logits.dtype)
    mx = m[:, None, :, None]
    my = m[:, None, None, :]
    logits = logits * mx + NEG * (1.0 - mx)
    logits = logits * my + NEG * (1.0 - my)
    tril = jnp.tril(jnp.ones((L, L), logits.dtype), k=-1)
    return logits - tril * 1.0e12


# --------------------------------------------------------------------------
# Deterministic parameter construction + smoke test
# --------------------------------------------------------------------------
def make_params(key, dim_in, dim_hid, out_size):
    in_size = dim_hid
    ks = jax.random.split(key, 14)

    def unif(k, shape, bound):
        return jax.random.uniform(k, shape, jnp.float32, -bound, bound)

    lstm_b = 1.0 / math.sqrt(dim_in)
    lin_b = 1.0 / math.sqrt(2 * dim_in)
    params = {
        'weight1': unif(ks[0], (in_size + 1, out_size, in_size + 1), 0.1),
        'weight2': unif(ks[1], (2 * in_size + 3, out_size), 0.1),
        'w_start': unif(ks[2], (dim_hid, 2 * dim_in), lin_b),
        'b_start': unif(ks[3], (dim_hid,), lin_b),
        'w_end': unif(ks[4], (dim_hid, 2 * dim_in), lin_b),
        'b_end': unif(ks[5], (dim_hid,), lin_b),
        'lstm': {
            'w_ih_f': unif(ks[6], (4 * dim_in, dim_in), lstm_b),
            'w_hh_f': unif(ks[7], (4 * dim_in, dim_in), lstm_b),
            'b_ih_f': unif(ks[8], (4 * dim_in,), lstm_b),
            'b_hh_f': unif(ks[9], (4 * dim_in,), lstm_b),
            'w_ih_b': unif(ks[10], (4 * dim_in, dim_in), lstm_b),
            'w_hh_b': unif(ks[11], (4 * dim_in, dim_in), lstm_b),
            'b_ih_b': unif(ks[12], (4 * dim_in,), lstm_b),
            'b_hh_b': unif(ks[13], (4 * dim_in,), lstm_b),
        },
    }
    return params


if __name__ == "__main__":
    key = jax.random.PRNGKey(0)
    B, L, dim_in, dim_hid, out_size = 2, 8, 16, 32, 4

    k_in, k_par = jax.random.split(key)
    params = make_params(k_par, dim_in, dim_hid, out_size)
    inputs = jax.random.normal(k_in, (B, L, dim_in), jnp.float32)

    lengths = jnp.array([L, 5])
    mask = (jnp.arange(L)[None, :] < lengths[:, None]).astype(jnp.float32)  # (B, L)

    # run the Pallas-backed forward
    out = biaffine_forward(inputs, mask, params, ab_position=False)
    out = jax.block_until_ready(out)
    assert out.shape == (B, out_size, L, L), out.shape

    # correctness check against the pure-JAX reference of the biaffine head
    # (bf16 MXU operands with f32 accumulation -> tolerance 2e-2)
    start, end = prepare_start_end(inputs, params, ab_position=False)
    ref = biaffine_reference(start, end, params['weight1'], params['weight2'], mask)
    np.testing.assert_allclose(np.asarray(out), np.asarray(ref), rtol=2e-2, atol=2e-2)

    print("KERNEL_OK")
</pallas_src>

<mosaic_0001>
module attributes {stable_mosaic.version = 11 : i64} {
  func.func @_biaffine_kernel(%arg0: i32, %arg1: i32, %arg2: memref<1x128x128xbf16, #tpu.memory_space<vmem>>, %arg3: memref<1x128x128xbf16, #tpu.memory_space<vmem>>, %arg4: memref<128x512xbf16, #tpu.memory_space<vmem>>, %arg5: memref<128x4xbf16, #tpu.memory_space<vmem>>, %arg6: memref<128x4xbf16, #tpu.memory_space<vmem>>, %arg7: memref<1x4xf32, #tpu.memory_space<vmem>>, %arg8: memref<1x128x1xf32, #tpu.memory_space<vmem>>, %arg9: memref<1x1x128xf32, #tpu.memory_space<vmem>>, %arg10: memref<1x4x128x128xf32, #tpu.memory_space<vmem>>) attributes {dimension_semantics = [#tpu.dimension_semantics<parallel>, #tpu.dimension_semantics<parallel>], iteration_bounds = array<i64: 2, 1>, scalar_prefetch = 0 : i64, scratch_operands = 0 : i64, tpu.core_type = #tpu.core_type<tc>, window_params = [{transform_indices = @transform_0, window_bounds = array<i64: 1, 128, 128>}, {transform_indices = @transform_1, window_bounds = array<i64: 1, 128, 128>}, {pipeline_mode = #tpu.pipeline_mode<synchronous>, transform_indices = @transform_2, window_bounds = array<i64: 128, 512>}, {pipeline_mode = #tpu.pipeline_mode<synchronous>, transform_indices = @transform_3, window_bounds = array<i64: 128, 4>}, {pipeline_mode = #tpu.pipeline_mode<synchronous>, transform_indices = @transform_4, window_bounds = array<i64: 128, 4>}, {pipeline_mode = #tpu.pipeline_mode<synchronous>, transform_indices = @transform_5, window_bounds = array<i64: 1, 4>}, {transform_indices = @transform_6, window_bounds = array<i64: 1, 128, 1>}, {transform_indices = @transform_7, window_bounds = array<i64: 1, 1, 128>}, {transform_indices = @transform_8, window_bounds = array<i64: 1, 4, 128, 128>}]} {
    %c128_i32 = arith.constant 128 : i32
    %0 = arith.muli %arg1, %c128_i32 : i32
    %1 = tpu.assume_multiple %0, 128 : i32
    %c0 = arith.constant 0 : index
    %c0_0 = arith.constant 0 : index
    %c0_1 = arith.constant 0 : index
    %2 = vector.load %arg2[%c0, %c0_0, %c0_1] : memref<1x128x128xbf16, #tpu.memory_space<vmem>>, vector<1x128x128xbf16>
    %3 = vector.shape_cast %2 : vector<1x128x128xbf16> to vector<128x128xbf16>
    %c0_2 = arith.constant 0 : index
    %c0_3 = arith.constant 0 : index
    %c0_4 = arith.constant 0 : index
    %4 = vector.load %arg3[%c0_2, %c0_3, %c0_4] : memref<1x128x128xbf16, #tpu.memory_space<vmem>>, vector<1x128x128xbf16>
    %5 = vector.shape_cast %4 : vector<1x128x128xbf16> to vector<128x128xbf16>
    %c0_5 = arith.constant 0 : index
    %6 = arith.index_cast %1 : i32 to index
    %c0_6 = arith.constant 0 : index
    %7 = vector.load %arg2[%c0_5, %6, %c0_6] : memref<1x128x128xbf16, #tpu.memory_space<vmem>>, vector<1x128x128xbf16>
    %8 = vector.shape_cast %7 : vector<1x128x128xbf16> to vector<128x128xbf16>
    %c0_7 = arith.constant 0 : index
    %9 = arith.index_cast %1 : i32 to index
    %c0_8 = arith.constant 0 : index
    %10 = vector.load %arg3[%c0_7, %9, %c0_8] : memref<1x128x128xbf16, #tpu.memory_space<vmem>>, vector<1x128x128xbf16>
    %11 = vector.shape_cast %10 : vector<1x128x128xbf16> to vector<128x128xbf16>
    %c0_9 = arith.constant 0 : index
    %c0_10 = arith.constant 0 : index
    %12 = vector.load %arg5[%c0_9, %c0_10] : memref<128x4xbf16, #tpu.memory_space<vmem>>, vector<128x4xbf16>
    %cst = arith.constant dense<0.000000e+00> : vector<4x128xf32>
    %13 = tpu.matmul %12, %3, %cst {dimension_numbers = #tpu.dot_dimension_numbers<[0], [1], [1], [0], [0, 1, 1, 0], [], []>} : vector<128x4xbf16>, vector<128x128xbf16>, vector<4x128xf32> -> vector<4x128xf32>
    %c0_11 = arith.constant 0 : index
    %c0_12 = arith.constant 0 : index
    %14 = vector.load %arg6[%c0_11, %c0_12] : memref<128x4xbf16, #tpu.memory_space<vmem>>, vector<128x4xbf16>
    %cst_13 = arith.constant dense<0.000000e+00> : vector<128x4xf32>
    %15 = tpu.matmul %11, %14, %cst_13 {dimension_numbers = #tpu.dot_dimension_numbers<[1], [0], [0], [1], [0, 0, 1, 1], [], []>} : vector<128x128xbf16>, vector<128x4xbf16>, vector<128x4xf32> -> vector<128x4xf32>
    %c0_14 = arith.constant 0 : index
    %c0_15 = arith.constant 0 : index
    %16 = vector.load %arg7[%c0_14, %c0_15] : memref<1x4xf32, #tpu.memory_space<vmem>>, vector<1x4xf32>
    %17 = vector.broadcast %16 : vector<1x4xf32> to vector<128x4xf32>
    %18 = arith.addf %15, %17 : vector<128x4xf32>
    %c0_16 = arith.constant 0 : index
    %c0_17 = arith.constant 0 : index
    %19 = vector.load %arg4[%c0_16, %c0_17] : memref<128x512xbf16, #tpu.memory_space<vmem>>, vector<128x512xbf16>
    %cst_18 = arith.constant dense<0.000000e+00> : vector<128x512xf32>
    %20 = tpu.matmul %8, %19, %cst_18 {dimension_numbers = #tpu.dot_dimension_numbers<[1], [0], [0], [1], [0, 0, 1, 1], [], []>} : vector<128x128xbf16>, vector<128x512xbf16>, vector<128x512xf32> -> vector<128x512xf32>
    %21 = arith.truncf %20 : vector<128x512xf32> to vector<128x512xbf16>
    %c0_19 = arith.constant 0 : index
    %c0_20 = arith.constant 0 : index
    %c0_21 = arith.constant 0 : index
    %22 = vector.load %arg8[%c0_19, %c0_20, %c0_21] : memref<1x128x1xf32, #tpu.memory_space<vmem>>, vector<1x128x1xf32>
    %23 = vector.shape_cast %22 : vector<1x128x1xf32> to vector<128x1xf32>
    %c0_22 = arith.constant 0 : index
    %c0_23 = arith.constant 0 : index
    %c0_24 = arith.constant 0 : index
    %24 = vector.load %arg9[%c0_22, %c0_23, %c0_24] : memref<1x1x128xf32, #tpu.memory_space<vmem>>, vector<1x1x128xf32>
    %25 = vector.shape_cast %24 : vector<1x1x128xf32> to vector<1x128xf32>
    %26 = tpu.iota {dimensions = array<i32: 0>} : vector<128x128xi32>
    %27 = vector.broadcast %1 : i32 to vector<128x128xi32>
    %28 = arith.addi %26, %27 : vector<128x128xi32>
    %29 = tpu.iota {dimensions = array<i32: 1>} : vector<128x128xi32>
    %30 = arith.cmpi sgt, %28, %29 : vector<128x128xi32>
    %31 = arith.extui %30 : vector<128x128xi1> to vector<128x128xi32>
    %32 = arith.sitofp %31 : vector<128x128xi32> to vector<128x128xf32>
    %33 = vector.broadcast %23 : vector<128x1xf32> to vector<128x128xf32>
    %34 = vector.broadcast %25 : vector<1x128xf32> to vector<128x128xf32>
    %35 = arith.mulf %33, %34 : vector<128x128xf32>
    %cst_25 = arith.constant 1.000000e+00 : f32
    %36 = vector.broadcast %cst_25 : f32 to vector<128x1xf32>
    %37 = arith.subf %36, %23 : vector<128x1xf32>
    %cst_26 = arith.constant -9.99999995E+11 : f32
    %38 = vector.broadcast %cst_26 : f32 to vector<128x1xf32>
    %39 = arith.mulf %38, %37 : vector<128x1xf32>
    %40 = vector.broadcast %39 : vector<128x1xf32> to vector<128x128xf32>
    %41 = vector.broadcast %25 : vector<1x128xf32> to vector<128x128xf32>
    %42 = arith.mulf %40, %41 : vector<128x128xf32>
    %cst_27 = arith.constant 1.000000e+00 : f32
    %43 = vector.broadcast %cst_27 : f32 to vector<1x128xf32>
    %44 = arith.subf %43, %25 : vector<1x128xf32>
    %cst_28 = arith.constant -9.99999995E+11 : f32
    %45 = vector.broadcast %cst_28 : f32 to vector<1x128xf32>
    %46 = arith.mulf %45, %44 : vector<1x128xf32>
    %47 = vector.broadcast %46 : vector<1x128xf32> to vector<128x128xf32>
    %48 = arith.addf %42, %47 : vector<128x128xf32>
    %cst_29 = arith.constant 9.99999995E+11 : f32
    %49 = vector.broadcast %cst_29 : f32 to vector<128x128xf32>
    %50 = arith.mulf %32, %49 : vector<128x128xf32>
    %51 = arith.subf %48, %50 : vector<128x128xf32>
    %52 = vector.extract_strided_slice %21 {offsets = [0, 0], sizes = [128, 128], strides = [1, 1]} : vector<128x512xbf16> to vector<128x128xbf16>
    %cst_30 = arith.constant dense<0.000000e+00> : vector<128x128xf32>
    %53 = tpu.matmul %52, %5, %cst_30 {dimension_numbers = #tpu.dot_dimension_numbers<[1], [1], [0], [0], [0, 0, 1, 0], [], []>} : vector<128x128xbf16>, vector<128x128xbf16>, vector<128x128xf32> -> vector<128x128xf32>
    %54 = vector.extract_strided_slice %18 {offsets = [0, 0], sizes = [128, 1], strides = [1, 1]} : vector<128x4xf32> to vector<128x1xf32>
    %55 = vector.extract_strided_slice %13 {offsets = [0, 0], sizes = [1, 128], strides = [1, 1]} : vector<4x128xf32> to vector<1x128xf32>
    %56 = vector.broadcast %54 : vector<128x1xf32> to vector<128x128xf32>
    %57 = vector.broadcast %55 : vector<1x128xf32> to vector<128x128xf32>
    %58 = arith.addf %56, %57 : vector<128x128xf32>
    %59 = arith.addf %53, %58 : vector<128x128xf32>
    %60 = arith.mulf %59, %35 : vector<128x128xf32>
    %61 = arith.addf %60, %51 : vector<128x128xf32>
    %c0_31 = arith.constant 0 : index
    %c0_32 = arith.constant 0 : index
    %c0_33 = arith.constant 0 : index
    %c0_34 = arith.constant 0 : index
    %62 = vector.load %arg10[%c0_31, %c0_32, %c0_33, %c0_34] : memref<1x4x128x128xf32, #tpu.memory_space<vmem>>, vector<1x1x128x128xf32>
    %63 = vector.shape_cast %62 : vector<1x1x128x128xf32> to vector<128x128xf32>
    %64 = vector.shape_cast %61 : vector<128x128xf32> to vector<1x1x128x128xf32>
    tpu.vector_store %arg10[%c0_31, %c0_32, %c0_33, %c0_34], %64 {strides = array<i32>} : memref<1x4x128x128xf32, #tpu.memory_space<vmem>>, vector<1x1x128x128xf32>,
    %65 = vector.extract_strided_slice %21 {offsets = [0, 128], sizes = [128, 128], strides = [1, 1]} : vector<128x512xbf16> to vector<128x128xbf16>
    %cst_35 = arith.constant dense<0.000000e+00> : vector<128x128xf32>
    %66 = tpu.matmul %65, %5, %cst_35 {dimension_numbers = #tpu.dot_dimension_numbers<[1], [1], [0], [0], [0, 0, 1, 0], [], []>} : vector<128x128xbf16>, vector<128x128xbf16>, vector<128x128xf32> -> vector<128x128xf32>
    %67 = vector.extract_strided_slice %18 {offsets = [0, 1], sizes = [128, 1], strides = [1, 1]} : vector<128x4xf32> to vector<128x1xf32>
    %68 = vector.extract_strided_slice %13 {offsets = [1, 0], sizes = [1, 128], strides = [1, 1]} : vector<4x128xf32> to vector<1x128xf32>
    %69 = vector.broadcast %67 : vector<128x1xf32> to vector<128x128xf32>
    %70 = vector.broadcast %68 : vector<1x128xf32> to vector<128x128xf32>
    %71 = arith.addf %69, %70 : vector<128x128xf32>
    %72 = arith.addf %66, %71 : vector<128x128xf32>
    %73 = arith.mulf %72, %35 : vector<128x128xf32>
    %74 = arith.addf %73, %51 : vector<128x128xf32>
    %c0_36 = arith.constant 0 : index
    %c1 = arith.constant 1 : index
    %c0_37 = arith.constant 0 : index
    %c0_38 = arith.constant 0 : index
    %75 = vector.load %arg10[%c0_36, %c1, %c0_37, %c0_38] : memref<1x4x128x128xf32, #tpu.memory_space<vmem>>, vector<1x1x128x128xf32>
    %76 = vector.shape_cast %75 : vector<1x1x128x128xf32> to vector<128x128xf32>
    %77 = vector.shape_cast %74 : vector<128x128xf32> to vector<1x1x128x128xf32>
    tpu.vector_store %arg10[%c0_36, %c1, %c0_37, %c0_38], %77 {strides = array<i32>} : memref<1x4x128x128xf32, #tpu.memory_space<vmem>>, vector<1x1x128x128xf32>,
    %78 = vector.extract_strided_slice %21 {offsets = [0, 256], sizes = [128, 128], strides = [1, 1]} : vector<128x512xbf16> to vector<128x128xbf16>
    %cst_39 = arith.constant dense<0.000000e+00> : vector<128x128xf32>
    %79 = tpu.matmul %78, %5, %cst_39 {dimension_numbers = #tpu.dot_dimension_numbers<[1], [1], [0], [0], [0, 0, 1, 0], [], []>} : vector<128x128xbf16>, vector<128x128xbf16>, vector<128x128xf32> -> vector<128x128xf32>
    %80 = vector.extract_strided_slice %18 {offsets = [0, 2], sizes = [128, 1], strides = [1, 1]} : vector<128x4xf32> to vector<128x1xf32>
    %81 = vector.extract_strided_slice %13 {offsets = [2, 0], sizes = [1, 128], strides = [1, 1]} : vector<4x128xf32> to vector<1x128xf32>
    %82 = vector.broadcast %80 : vector<128x1xf32> to vector<128x128xf32>
    %83 = vector.broadcast %81 : vector<1x128xf32> to vector<128x128xf32>
    %84 = arith.addf %82, %83 : vector<128x128xf32>
    %85 = arith.addf %79, %84 : vector<128x128xf32>
    %86 = arith.mulf %85, %35 : vector<128x128xf32>
    %87 = arith.addf %86, %51 : vector<128x128xf32>
    %c0_40 = arith.constant 0 : index
    %c2 = arith.constant 2 : index
    %c0_41 = arith.constant 0 : index
    %c0_42 = arith.constant 0 : index
    %88 = vector.load %arg10[%c0_40, %c2, %c0_41, %c0_42] : memref<1x4x128x128xf32, #tpu.memory_space<vmem>>, vector<1x1x128x128xf32>
    %89 = vector.shape_cast %88 : vector<1x1x128x128xf32> to vector<128x128xf32>
    %90 = vector.shape_cast %87 : vector<128x128xf32> to vector<1x1x128x128xf32>
    tpu.vector_store %arg10[%c0_40, %c2, %c0_41, %c0_42], %90 {strides = array<i32>} : memref<1x4x128x128xf32, #tpu.memory_space<vmem>>, vector<1x1x128x128xf32>,
    %91 = vector.extract_strided_slice %21 {offsets = [0, 384], sizes = [128, 128], strides = [1, 1]} : vector<128x512xbf16> to vector<128x128xbf16>
    %cst_43 = arith.constant dense<0.000000e+00> : vector<128x128xf32>
    %92 = tpu.matmul %91, %5, %cst_43 {dimension_numbers = #tpu.dot_dimension_numbers<[1], [1], [0], [0], [0, 0, 1, 0], [], []>} : vector<128x128xbf16>, vector<128x128xbf16>, vector<128x128xf32> -> vector<128x128xf32>
    %93 = vector.extract_strided_slice %18 {offsets = [0, 3], sizes = [128, 1], strides = [1, 1]} : vector<128x4xf32> to vector<128x1xf32>
    %94 = vector.extract_strided_slice %13 {offsets = [3, 0], sizes = [1, 128], strides = [1, 1]} : vector<4x128xf32> to vector<1x128xf32>
    %95 = vector.broadcast %93 : vector<128x1xf32> to vector<128x128xf32>
    %96 = vector.broadcast %94 : vector<1x128xf32> to vector<128x128xf32>
    %97 = arith.addf %95, %96 : vector<128x128xf32>
    %98 = arith.addf %92, %97 : vector<128x128xf32>
    %99 = arith.mulf %98, %35 : vector<128x128xf32>
    %100 = arith.addf %99, %51 : vector<128x128xf32>
    %c0_44 = arith.constant 0 : index
    %c3 = arith.constant 3 : index
    %c0_45 = arith.constant 0 : index
    %c0_46 = arith.constant 0 : index
    %101 = vector.load %arg10[%c0_44, %c3, %c0_45, %c0_46] : memref<1x4x128x128xf32, #tpu.memory_space<vmem>>, vector<1x1x128x128xf32>
    %102 = vector.shape_cast %101 : vector<1x1x128x128xf32> to vector<128x128xf32>
    %103 = vector.shape_cast %100 : vector<128x128xf32> to vector<1x1x128x128xf32>
    tpu.vector_store %arg10[%c0_44, %c3, %c0_45, %c0_46], %103 {strides = array<i32>} : memref<1x4x128x128xf32, #tpu.memory_space<vmem>>, vector<1x1x128x128xf32>,
    return
  }
  func.func @transform_0(%arg0: i32, %arg1: i32) -> (i32, i32, i32) {
    %c0_i32 = arith.constant 0 : i32
    %c0_i32_0 = arith.constant 0 : i32
    %c0_i32_1 = arith.constant 0 : i32
    return %arg0, %c0_i32, %c0_i32_0 : i32, i32, i32
  }
  func.func @transform_1(%arg0: i32, %arg1: i32) -> (i32, i32, i32) {
    %c0_i32 = arith.constant 0 : i32
    %c0_i32_0 = arith.constant 0 : i32
    %c0_i32_1 = arith.constant 0 : i32
    return %arg0, %c0_i32, %c0_i32_0 : i32, i32, i32
  }
  func.func @transform_2(%arg0: i32, %arg1: i32) -> (i32, i32) {
    %c0_i32 = arith.constant 0 : i32
    %c0_i32_0 = arith.constant 0 : i32
    %c0_i32_1 = arith.constant 0 : i32
    return %c0_i32, %c0_i32_0 : i32, i32
  }
  func.func @transform_3(%arg0: i32, %arg1: i32) -> (i32, i32) {
    %c0_i32 = arith.constant 0 : i32
    %c0_i32_0 = arith.constant 0 : i32
    %c0_i32_1 = arith.constant 0 : i32
    return %c0_i32, %c0_i32_0 : i32, i32
  }
  func.func @transform_4(%arg0: i32, %arg1: i32) -> (i32, i32) {
    %c0_i32 = arith.constant 0 : i32
    %c0_i32_0 = arith.constant 0 : i32
    %c0_i32_1 = arith.constant 0 : i32
    return %c0_i32, %c0_i32_0 : i32, i32
  }
  func.func @transform_5(%arg0: i32, %arg1: i32) -> (i32, i32) {
    %c0_i32 = arith.constant 0 : i32
    %c0_i32_0 = arith.constant 0 : i32
    %c0_i32_1 = arith.constant 0 : i32
    return %c0_i32, %c0_i32_0 : i32, i32
  }
  func.func @transform_6(%arg0: i32, %arg1: i32) -> (i32, i32, i32) {
    %c0_i32 = arith.constant 0 : i32
    %c0_i32_0 = arith.constant 0 : i32
    return %arg0, %arg1, %c0_i32 : i32, i32, i32
  }
  func.func @transform_7(%arg0: i32, %arg1: i32) -> (i32, i32, i32) {
    %c0_i32 = arith.constant 0 : i32
    %c0_i32_0 = arith.constant 0 : i32
    %c0_i32_1 = arith.constant 0 : i32
    return %arg0, %c0_i32, %c0_i32_0 : i32, i32, i32
  }
  func.func @transform_8(%arg0: i32, %arg1: i32) -> (i32, i32, i32, i32) {
    %c0_i32 = arith.constant 0 : i32
    %c0_i32_0 = arith.constant 0 : i32
    %c0_i32_1 = arith.constant 0 : i32
    return %arg0, %c0_i32, %arg1, %c0_i32_0 : i32, i32, i32, i32
  }
}

</mosaic_0001>

<llo_original>
// kernel: tpu_custom_call.1
$region0: #{tpu_custom_call.1}
  #allocation0 [shape = 'u32[]', space=smem, size = 0x4, offset = 0x4, fixed_abs, tag = 'smem constant byte address 0x4 - core index']
  #allocation1 [shape = 'u32[144,128]{1,0:T(1,128)}', space=vmem, size = 0x12000, scoped, tag = 'internal scratch']
  %s0 = inlined_call_operand.vmem [shape: bf16[2,128,128], index: 0, kind: input, shape index: {}]
  %s1 = inlined_call_operand.hbm [shape: bf16[2,128,128], index: 1, kind: input, shape index: {}]
  %s2 = inlined_call_operand.vmem [shape: bf16[128,512], index: 2, kind: input, shape index: {}]
  %s3 = inlined_call_operand.vmem [shape: bf16[128,4], index: 3, kind: input, shape index: {}]
  %s4 = inlined_call_operand.vmem [shape: bf16[128,4], index: 4, kind: input, shape index: {}]
  %s5 = inlined_call_operand.vmem [shape: f32[1,4], index: 5, kind: input, shape index: {}]
  %s6 = inlined_call_operand.vmem [shape: f32[2,128,1], index: 6, kind: input, shape index: {}]
  %s7 = inlined_call_operand.vmem [shape: f32[2,1,128], index: 7, kind: input, shape index: {}]
  %s8 = inlined_call_operand.hbm [shape: f32[2,4,128,128], index: 8, kind: output, shape index: {}]
  %s9 = sld [smem:[#allocation0]]
  $region69: #{tpu_custom_call.1} parent=0
    _
  %s11 = ssub.s32 1, %s9
  %s12 = scalar_select 0, %s11, %s9
  $region1: #{tpu_custom_call.1} parent=0
    #allocation2 [shape = 'u8[65536]{0}', space=vmem, size = 0x10000, scoped, tag = 'input window, operand 1']
    #allocation3 [shape = 's32[2]{0}', space=sflag, size = 0x8, scoped, tag = 'scoped memory for tpu_custom_call.1']
    #allocation4 [shape = 's32[2]{0}', space=sflag, size = 0x8, scoped, tag = 'scoped memory for tpu_custom_call.1']
    #allocation5 [shape = 'u8[524288]{0}', space=vmem, size = 0x80000, scoped, tag = 'output window, operand 0']
    %13 = vsyncpa [#allocation3], 0
    %s14 = scalar_lea.sflag [#allocation3], 1
    %15 = vsyncpa %s14, 0
    %16 = vsyncpa [#allocation4], 0
    %s17 = scalar_lea.sflag [#allocation4], 1
    %18 = vsyncpa %s17, 0
    loop: start=0, step=1, limit=4
    $region2: #{tpu_custom_call.1} parent=1 // loop_pre_header
      _
    $region3: #{tpu_custom_call.1} parent=1 // loop_header
      %s20 = sphi 0, %s24
      %p21 = scmp.ge.s32.totalorder %s20, 4
      %s27 = sphi 0, %s39
      %s28 = sphi 0, %s35
      %s29 = sphi 0, %s27
      %s30 = sphi 0, %s28
      %s31 = sphi 0, %s29
      %s32 = sphi 0, %s30
      %s42 = sphi 0, %s44
      %s45 = sphi 0, %s42
      %s46 = sphi 0, %s45
      %s62 = sphi 0, %s46
      %s68 = sphi 0, %s70
      %s71 = sphi 0, %s68
      %s72 = sphi 0, %s71
      %s88 = sphi 0, %s72
      %s92 = sphi 0, %s92
      %s94 = sphi 0, %s92
      %s95 = sphi 0, %s94
      %s109 = sphi 0, %s95
      %s113 = sphi 0, %s113
      %s115 = sphi 0, %s113
      %s116 = sphi 0, %s115
      %s130 = sphi 0, %s116
      %s134 = sphi 0, %s134
      %s136 = sphi 0, %s134
      %s137 = sphi 0, %s136
      %s151 = sphi 0, %s137
      %s155 = sphi 0, %s155
      %s157 = sphi 0, %s155
      %s158 = sphi 0, %s157
      %s172 = sphi 0, %s158
      %s180 = sphi 0, %s182
      %s183 = sphi 0, %s180
      %s184 = sphi 0, %s183
      %s200 = sphi 0, %s184
      %s206 = sphi 0, %s208
      %s209 = sphi 0, %s206
      %s210 = sphi 0, %s209
      %s226 = sphi 0, %s210
      %s234 = sphi 0, %s236
      %s237 = sphi 0, %s234
      %s238 = sphi 0, %s237
      %s254 = sphi 0, %s238
    $region4: #{tpu_custom_call.1} parent=1 // loop_header_branch
      %23 = sbr.rel (%p21) target = $region8
    $region5: #{tpu_custom_call.1} parent=1 // loop_body
      %s25 = ssub.s32 %s20, 1
      %s26 = ssub.s32 %s20, 2
      %s33 = sadd.s32 1, %s28
      %p34 = scmp.ge.s32.totalorder %s33, 1
      %s35 = scalar_select %p34, 0, %s33
      %s36 = sadd.s32 1, %s27
      %s37 = scalar_select %p34, %s36, %s27
      %p38 = scmp.ge.s32.totalorder %s37, 2
      %s39 = scalar_select %p38, 0, %s37
      %s40 = ssub.s32 %s27, %s39
      %p41 = scmp.eq.s32.totalorder %s40, 0
      %s43 = sadd.s32 %s42, 1
      %s44 = scalar_select %p41, %s42, %s43
      %p47 = pneg %p41
      %p48 = scmp.eq.s32.totalorder %s20, 1
      %p49 = por %p47, %p48
      %p50 = scmp.ne.s32.totalorder %s42, %s45
      %p51 = scmp.eq.s32.totalorder %s20, 0
      %p52 = por %p50, %p51
      %p53 = scmp.ne.s32.totalorder %s42, %s45
      %p54 = scmp.eq.s32.totalorder %s25, 1
      %p55 = por %p53, %p54
      %p56 = scmp.ne.s32.totalorder %s45, %s46
      %p57 = scmp.eq.s32.totalorder %s25, 0
      %p58 = por %p56, %p57
      %p59 = scmp.ne.s32.totalorder %s45, %s46
      %p60 = scmp.eq.s32.totalorder %s26, 1
      %p61 = por %p59, %p60
      %p63 = scmp.ne.s32.totalorder %s46, %s62
      %p64 = scmp.eq.s32.totalorder %s26, 0
      %p65 = por %p63, %p64
      %s66 = ssub.s32 %s27, %s39
      %p67 = scmp.eq.s32.totalorder %s66, 0
      %s69 = sadd.s32 %s68, 1
      %s70 = scalar_select %p67, %s68, %s69
      %p73 = pneg %p67
      %p74 = scmp.eq.s32.totalorder %s20, 1
      %p75 = por %p73, %p74
      %p76 = scmp.ne.s32.totalorder %s68, %s71
      %p77 = scmp.eq.s32.totalorder %s20, 0
      %p78 = por %p76, %p77
      %p79 = scmp.ne.s32.totalorder %s68, %s71
      %p80 = scmp.eq.s32.totalorder %s25, 1
      %p81 = por %p79, %p80
      %p82 = scmp.ne.s32.totalorder %s71, %s72
      %p83 = scmp.eq.s32.totalorder %s25, 0
      %p84 = por %p82, %p83
      %p85 = scmp.ne.s32.totalorder %s71, %s72
      %p86 = scmp.eq.s32.totalorder %s26, 1
      %p87 = por %p85, %p86
      %p89 = scmp.ne.s32.totalorder %s72, %s88
      %p90 = scmp.eq.s32.totalorder %s26, 0
      %p91 = por %p89, %p90
      %s93 = sadd.s32 %s92, 1
      %p96 = scmp.eq.s32.totalorder %s20, 1
      %p97 = scmp.ne.s32.totalorder %s92, %s94
      %p98 = scmp.eq.s32.totalorder %s20, 0
      %p99 = por %p97, %p98
      %p100 = scmp.ne.s32.totalorder %s92, %s94
      %p101 = scmp.eq.s32.totalorder %s25, 1
      %p102 = por %p100, %p101
      %p103 = scmp.ne.s32.totalorder %s94, %s95
      %p104 = scmp.eq.s32.totalorder %s25, 0
      %p105 = por %p103, %p104
      %p106 = scmp.ne.s32.totalorder %s94, %s95
      %p107 = scmp.eq.s32.totalorder %s26, 1
      %p108 = por %p106, %p107
      %p110 = scmp.ne.s32.totalorder %s95, %s109
      %p111 = scmp.eq.s32.totalorder %s26, 0
      %p112 = por %p110, %p111
      %s114 = sadd.s32 %s113, 1
      %p117 = scmp.eq.s32.totalorder %s20, 1
      %p118 = scmp.ne.s32.totalorder %s113, %s115
      %p119 = scmp.eq.s32.totalorder %s20, 0
      %p120 = por %p118, %p119
      %p121 = scmp.ne.s32.totalorder %s113, %s115
      %p122 = scmp.eq.s32.totalorder %s25, 1
      %p123 = por %p121, %p122
      %p124 = scmp.ne.s32.totalorder %s115, %s116
      %p125 = scmp.eq.s32.totalorder %s25, 0
      %p126 = por %p124, %p125
      %p127 = scmp.ne.s32.totalorder %s115, %s116
      %p128 = scmp.eq.s32.totalorder %s26, 1
      %p129 = por %p127, %p128
      %p131 = scmp.ne.s32.totalorder %s116, %s130
      %p132 = scmp.eq.s32.totalorder %s26, 0
      %p133 = por %p131, %p132
      %s135 = sadd.s32 %s134, 1
      %p138 = scmp.eq.s32.totalorder %s20, 1
      %p139 = scmp.ne.s32.totalorder %s134, %s136
      %p140 = scmp.eq.s32.totalorder %s20, 0
      %p141 = por %p139, %p140
      %p142 = scmp.ne.s32.totalorder %s134, %s136
      %p143 = scmp.eq.s32.totalorder %s25, 1
      %p144 = por %p142, %p143
      %p145 = scmp.ne.s32.totalorder %s136, %s137
      %p146 = scmp.eq.s32.totalorder %s25, 0
      %p147 = por %p145, %p146
      %p148 = scmp.ne.s32.totalorder %s136, %s137
      %p149 = scmp.eq.s32.totalorder %s26, 1
      %p150 = por %p148, %p149
      %p152 = scmp.ne.s32.totalorder %s137, %s151
      %p153 = scmp.eq.s32.totalorder %s26, 0
      %p154 = por %p152, %p153
      %s156 = sadd.s32 %s155, 1
      %p159 = scmp.eq.s32.totalorder %s20, 1
      %p160 = scmp.ne.s32.totalorder %s155, %s157
      %p161 = scmp.eq.s32.totalorder %s20, 0
      %p162 = por %p160, %p161
      %p163 = scmp.ne.s32.totalorder %s155, %s157
      %p164 = scmp.eq.s32.totalorder %s25, 1
      %p165 = por %p163, %p164
      %p166 = scmp.ne.s32.totalorder %s157, %s158
      %p167 = scmp.eq.s32.totalorder %s25, 0
      %p168 = por %p166, %p167
      %p169 = scmp.ne.s32.totalorder %s157, %s158
      %p170 = scmp.eq.s32.totalorder %s26, 1
      %p171 = por %p169, %p170
      %p173 = scmp.ne.s32.totalorder %s158, %s172
      %p174 = scmp.eq.s32.totalorder %s26, 0
      %p175 = por %p173, %p174
      %s176 = ssub.s32 %s27, %s39
      %s177 = ssub.s32 %s28, %s35
      %s178 = sor.u32 %s176, %s177
      %p179 = scmp.eq.s32.totalorder %s178, 0
      %s181 = sadd.s32 %s180, 1
      %s182 = scalar_select %p179, %s180, %s181
      %p185 = pneg %p179
      %p186 = scmp.eq.s32.totalorder %s20, 1
      %p187 = por %p185, %p186
      %p188 = scmp.ne.s32.totalorder %s180, %s183
      %p189 = scmp.eq.s32.totalorder %s20, 0
      %p190 = por %p188, %p189
      %p191 = scmp.ne.s32.totalorder %s180, %s183
      %p192 = scmp.eq.s32.totalorder %s25, 1
      %p193 = por %p191, %p192
      %p194 = scmp.ne.s32.totalorder %s183, %s184
      %p195 = scmp.eq.s32.totalorder %s25, 0
      %p196 = por %p194, %p195
      %p197 = scmp.ne.s32.totalorder %s183, %s184
      %p198 = scmp.eq.s32.totalorder %s26, 1
      %p199 = por %p197, %p198
      %p201 = scmp.ne.s32.totalorder %s184, %s200
      %p202 = scmp.eq.s32.totalorder %s26, 0
      %p203 = por %p201, %p202
      %s204 = ssub.s32 %s27, %s39
      %p205 = scmp.eq.s32.totalorder %s204, 0
      %s207 = sadd.s32 %s206, 1
      %s208 = scalar_select %p205, %s206, %s207
      %p211 = pneg %p205
      %p212 = scmp.eq.s32.totalorder %s20, 1
      %p213 = por %p211, %p212
      %p214 = scmp.ne.s32.totalorder %s206, %s209
      %p215 = scmp.eq.s32.totalorder %s20, 0
      %p216 = por %p214, %p215
      %p217 = scmp.ne.s32.totalorder %s206, %s209
      %p218 = scmp.eq.s32.totalorder %s25, 1
      %p219 = por %p217, %p218
      %p220 = scmp.ne.s32.totalorder %s209, %s210
      %p221 = scmp.eq.s32.totalorder %s25, 0
      %p222 = por %p220, %p221
      %p223 = scmp.ne.s32.totalorder %s209, %s210
      %p224 = scmp.eq.s32.totalorder %s26, 1
      %p225 = por %p223, %p224
      %p227 = scmp.ne.s32.totalorder %s210, %s226
      %p228 = scmp.eq.s32.totalorder %s26, 0
      %p229 = por %p227, %p228
      %s230 = ssub.s32 %s27, %s39
      %s231 = ssub.s32 %s28, %s35
      %s232 = sor.u32 %s230, %s231
      %p233 = scmp.eq.s32.totalorder %s232, 0
      %s235 = sadd.s32 %s234, 1
      %s236 = scalar_select %p233, %s234, %s235
      %p239 = pneg %p233
      %p240 = scmp.eq.s32.totalorder %s20, 1
      %p241 = por %p239, %p240
      %p242 = scmp.ne.s32.totalorder %s234, %s237
      %p243 = scmp.eq.s32.totalorder %s20, 0
      %p244 = por %p242, %p243
      %p245 = scmp.ne.s32.totalorder %s234, %s237
      %p246 = scmp.eq.s32.totalorder %s25, 1
      %p247 = por %p245, %p246
      %p248 = scmp.ne.s32.totalorder %s237, %s238
      %p249 = scmp.eq.s32.totalorder %s25, 0
      %p250 = por %p248, %p249
      %p251 = scmp.ne.s32.totalorder %s237, %s238
      %p252 = scmp.eq.s32.totalorder %s26, 1
      %p253 = por %p251, %p252
      %p255 = scmp.ne.s32.totalorder %s238, %s254
      %p256 = scmp.eq.s32.totalorder %s26, 0
      %p257 = por %p255, %p256
      %p258 = scmp.le.s32.totalorder 1, %s20
      %p259 = scmp.lt.s32.totalorder %s20, 3
      %p260 = pnand %p258, %p259
      %p261 = pneg %p260
      // Predicated region
      $region9: #{tpu_custom_call.1} parent=5 // pred_check
        _
      $region10: #{tpu_custom_call.1} parent=5 // pred_check_branch
        %263 = sbr.rel (%p260) target = $region12
      $region11: #{tpu_custom_call.1} parent=5 // pred_region
        %s264 = ssub.s32 %s20, 1
        // Predicated region
        $region13: #{tpu_custom_call.1} parent=11 // pred_check
          %p265 = pneg %p105
        $region14: #{tpu_custom_call.1} parent=11 // pred_check_branch
          %267 = sbr.rel (%p265) target = $region16
        $region15: #{tpu_custom_call.1} parent=11 // pred_region
          _
        $region16: #{tpu_custom_call.1} parent=11 // pred_fallthru
          _
        // Predicated region
        $region17: #{tpu_custom_call.1} parent=11 // pred_check
          %p268 = pneg %p126
        $region18: #{tpu_custom_call.1} parent=11 // pred_check_branch
          %270 = sbr.rel (%p268) target = $region20
        $region19: #{tpu_custom_call.1} parent=11 // pred_region
          _
        $region20: #{tpu_custom_call.1} parent=11 // pred_fallthru
          _
        // Predicated region
        $region21: #{tpu_custom_call.1} parent=11 // pred_check
          %p271 = pneg %p147
        $region22: #{tpu_custom_call.1} parent=11 // pred_check_branch
          %273 = sbr.rel (%p271) target = $region24
        $region23: #{tpu_custom_call.1} parent=11 // pred_region
          _
        $region24: #{tpu_custom_call.1} parent=11 // pred_fallthru
          _
        // Predicated region
        $region25: #{tpu_custom_call.1} parent=11 // pred_check
          %p274 = pneg %p168
        $region26: #{tpu_custom_call.1} parent=11 // pred_check_branch
          %276 = sbr.rel (%p274) target = $region28
        $region27: #{tpu_custom_call.1} parent=11 // pred_region
          _
        $region28: #{tpu_custom_call.1} parent=11 // pred_fallthru
          _
      $region12: #{tpu_custom_call.1} parent=5 // pred_fallthru
        _
      %p277 = scmp.lt.s32.totalorder %s20, 2
      // Predicated region
      $region29: #{tpu_custom_call.1} parent=5 // pred_check
        %p278 = pneg %p277
      $region30: #{tpu_custom_call.1} parent=5 // pred_check_branch
        %280 = sbr.rel (%p278) target = $region32
      $region31: #{tpu_custom_call.1} parent=5 // pred_region
        // Predicated region
        $region33: #{tpu_custom_call.1} parent=31 // pred_check
          %p281 = pneg %p52
        $region34: #{tpu_custom_call.1} parent=31 // pred_check_branch
          %283 = sbr.rel (%p281) target = $region36
        $region35: #{tpu_custom_call.1} parent=31 // pred_region
          %p284 = scmp.lt.s32.totalorder %s27, 1
          %s285 = scalar_select %p284, %s27, 1
          %s286 = smul.addr %s285, 16
          %s287 = smul.addr %s286, 4
          %s288 = scalar_lea.vmem %s0, %s287
        $region36: #{tpu_custom_call.1} parent=31 // pred_fallthru
          _
        // Predicated region
        $region37: #{tpu_custom_call.1} parent=31 // pred_check
          %p289 = pneg %p78
        $region38: #{tpu_custom_call.1} parent=31 // pred_check_branch
          %291 = sbr.rel (%p289) target = $region40
        $region39: #{tpu_custom_call.1} parent=31 // pred_region
          %s292 = sand.u32 %s68, 1
          %s293 = scalar_lea.sflag [#allocation3], %s292
          %s294 = sand.u32 %s68, 1
          %s295 = smul.addr %s294, 64
          %s296 = scalar_lea.vmem [#allocation2], %s295
          %s298 = ssub.s32 1024, 1024
          %299 = vsyncadd %s293, %s298
          %s300 = smul.addr %s27, 16
          %s301 = smul.addr %s300, 64
          %s302 = scalar_lea.hbm %s1, %s301
          %s303 = sshll.u32 %s296, 4
          %s304 = int_to_ptr.vmem [resolvable:$true] %s303
          %309 = dma.hbm_to_vmem [thread:$0]  %s302, 1024, %s304, %s293, 64, 64, 4
        $region40: #{tpu_custom_call.1} parent=31 // pred_fallthru
          _
        // Predicated region
        $region41: #{tpu_custom_call.1} parent=31 // pred_check
          %p310 = pneg %p190
        $region42: #{tpu_custom_call.1} parent=31 // pred_check_branch
          %312 = sbr.rel (%p310) target = $region44
        $region43: #{tpu_custom_call.1} parent=31 // pred_region
          %s313 = smul.u32 16, %s28
          %p314 = scmp.lt.s32.totalorder %s27, 1
          %s315 = scalar_select %p314, %s27, 1
          %p316 = scmp.lt.s32.totalorder %s313, 15
          %s317 = scalar_select %p316, %s313, 15
          %s318 = smul.addr %s315, 16
          %s319 = sadd.s32 %s317, %s318
          %s320 = smul.addr %s319, 8
          %s321 = scalar_lea.vmem %s6, %s320
          %s322 = smul.u32 16, %s28
        $region44: #{tpu_custom_call.1} parent=31 // pred_fallthru
          _
        // Predicated region
        $region45: #{tpu_custom_call.1} parent=31 // pred_check
          %p323 = pneg %p216
        $region46: #{tpu_custom_call.1} parent=31 // pred_check_branch
          %325 = sbr.rel (%p323) target = $region48
        $region47: #{tpu_custom_call.1} parent=31 // pred_region
          %p326 = scmp.lt.s32.totalorder %s27, 1
          %s327 = scalar_select %p326, %s27, 1
          %s328 = scalar_lea.vmem %s7, %s327
        $region48: #{tpu_custom_call.1} parent=31 // pred_fallthru
          _
      $region32: #{tpu_custom_call.1} parent=5 // pred_fallthru
        _
      %p329 = scmp.le.s32.totalorder 1, %s20
      %p330 = scmp.lt.s32.totalorder %s20, 3
      %p331 = pnand %p329, %p330
      %p332 = pneg %p331
      // Predicated region
      $region49: #{tpu_custom_call.1} parent=5 // pred_check
        _
      $region50: #{tpu_custom_call.1} parent=5 // pred_check_branch
        %334 = sbr.rel (%p331) target = $region52
      $region51: #{tpu_custom_call.1} parent=5 // pred_region
        %s335 = ssub.s32 %s20, 1
        %s336 = sand.u32 %s71, 1
        %s337 = scalar_lea.sflag [#allocation3], %s336
        %s338 = sand.u32 %s71, 1
        %s339 = smul.addr %s338, 64
        %s340 = scalar_lea.vmem [#allocation2], %s339
        // Predicated region
        $region53: #{tpu_custom_call.1} parent=51 // pred_check
          %p341 = pneg %p84
        $region54: #{tpu_custom_call.1} parent=51 // pred_check_branch
          %343 = sbr.rel (%p341) target = $region56
        $region55: #{tpu_custom_call.1} parent=51 // pred_region
          %344 = dma.done %s337, 1024
        $region56: #{tpu_custom_call.1} parent=51 // pred_fallthru
          _
        %p345 = scmp.lt.s32.totalorder %s29, 1
        %s346 = scalar_select %p345, %s29, 1
        %s347 = smul.addr %s346, 16
        %s348 = smul.addr %s347, 4
        %s349 = scalar_lea.vmem %s0, %s348
        %p350 = pneg %p58
        %p351 = pneg %p55
        %s352 = sand.u32 %s71, 1
        %s353 = scalar_lea.sflag [#allocation3], %s352
        %s354 = sand.u32 %s71, 1
        %s355 = smul.addr %s354, 64
        %s356 = scalar_lea.vmem [#allocation2], %s355
        %p357 = pneg %p84
        %p358 = pneg %p81
        %p359 = pneg %p105
        %p360 = pneg %p102
        %p361 = pneg %p126
        %p362 = pneg %p123
        %p363 = pneg %p147
        %p364 = pneg %p144
        %p365 = pneg %p168
        %p366 = pneg %p165
        %s367 = smul.u32 16, %s30
        %p368 = scmp.lt.s32.totalorder %s29, 1
        %s369 = scalar_select %p368, %s29, 1
        %p370 = scmp.lt.s32.totalorder %s367, 15
        %s371 = scalar_select %p370, %s367, 15
        %s372 = smul.addr %s369, 16
        %s373 = sadd.s32 %s371, %s372
        %s374 = smul.addr %s373, 8
        %s375 = scalar_lea.vmem %s6, %s374
        %p376 = pneg %p196
        %p377 = pneg %p193
        %p378 = scmp.lt.s32.totalorder %s29, 1
        %s379 = scalar_select %p378, %s29, 1
        %s380 = scalar_lea.vmem %s7, %s379
        %p381 = pneg %p222
        %p382 = pneg %p219
        %p383 = pneg %p250
        %p384 = pneg %p247
        %s385 = sand.u32 %s237, 1
        %s386 = scalar_lea.sflag [#allocation4], %s385
        %s387 = sand.u32 %s237, 1
        %s388 = smul.addr %s387, 512
        %s389 = scalar_lea.vmem [#allocation5], %s388
        %p390 = scmp.lt.s32.totalorder %s29, 1
        %s391 = scalar_select %p390, %s29, 1
        %s392 = smul.addr %s391, 16
        %s393 = smul.addr %s392, 4
        %s394 = scalar_lea.vmem %s0, %s393
        %s395 = smul.u32 16, %s30
        %p396 = scmp.lt.s32.totalorder %s29, 1
        %s397 = scalar_select %p396, %s29, 1
        %p398 = scmp.lt.s32.totalorder %s395, 15
        %s399 = scalar_select %p398, %s395, 15
        %s400 = smul.addr %s397, 16
        %s401 = sadd.s32 %s399, %s400
        %s402 = smul.addr %s401, 8
        %s403 = scalar_lea.vmem %s6, %s402
        %s404 = smul.u32 16, %s30
        %p405 = scmp.lt.s32.totalorder %s29, 1
        %s406 = scalar_select %p405, %s29, 1
        %s407 = scalar_lea.vmem %s7, %s406
        %s408 = smul.u32 16, %s30
        %s410 = smul.u32 %s30, 128
        %v411 = vld [vmem:[%s394] sm:$0xf]
        %v412 = vld [vmem:[%s394 + $0x4] sm:$0xf]
        %v413 = vld [vmem:[%s394 + $0x8] sm:$0xf]
        %v414 = vld [vmem:[%s394 + $0xc] sm:$0xf]
        %v415 = vld [vmem:[%s394 + $0x10] sm:$0xf]
        %v416 = vld [vmem:[%s394 + $0x14] sm:$0xf]
        %v417 = vld [vmem:[%s394 + $0x18] sm:$0xf]
        %v418 = vld [vmem:[%s394 + $0x1c] sm:$0xf]
        %v419 = vld [vmem:[%s394 + $0x20] sm:$0xf]
        %v420 = vld [vmem:[%s394 + $0x24] sm:$0xf]
        %v421 = vld [vmem:[%s394 + $0x28] sm:$0xf]
        %v422 = vld [vmem:[%s394 + $0x2c] sm:$0xf]
        %v423 = vld [vmem:[%s394 + $0x30] sm:$0xf]
        %v424 = vld [vmem:[%s394 + $0x34] sm:$0xf]
        %v425 = vld [vmem:[%s394 + $0x38] sm:$0xf]
        %v426 = vld [vmem:[%s394 + $0x3c] sm:$0xf]
        %v427 = vld [vmem:[%s340] sm:$0xf]
        %v428 = vld [vmem:[%s340 + $0x4] sm:$0xf]
        %v429 = vld [vmem:[%s340 + $0x8] sm:$0xf]
        %v430 = vld [vmem:[%s340 + $0xc] sm:$0xf]
        %v431 = vld [vmem:[%s340 + $0x10] sm:$0xf]
        %v432 = vld [vmem:[%s340 + $0x14] sm:$0xf]
        %v433 = vld [vmem:[%s340 + $0x18] sm:$0xf]
        %v434 = vld [vmem:[%s340 + $0x1c] sm:$0xf]
        %v435 = vld [vmem:[%s340 + $0x20] sm:$0xf]
        %v436 = vld [vmem:[%s340 + $0x24] sm:$0xf]
        %v437 = vld [vmem:[%s340 + $0x28] sm:$0xf]
        %v438 = vld [vmem:[%s340 + $0x2c] sm:$0xf]
        %v439 = vld [vmem:[%s340 + $0x30] sm:$0xf]
        %v440 = vld [vmem:[%s340 + $0x34] sm:$0xf]
        %v441 = vld [vmem:[%s340 + $0x38] sm:$0xf]
        %v442 = vld [vmem:[%s340 + $0x3c] sm:$0xf]
        %s443 = sshra.s32 %s410, 3
        %s444 = sand.u32 %s410, 7
        %s445 = smul.addr %s443, 4
        %s446 = scalar_lea.vmem %s394, %s445
        %v447 = vld [vmem:[%s446] sm:$0xf]
        %v448 = vld [vmem:[%s446 + $0x4] sm:$0xf]
        %v449 = vld [vmem:[%s446 + $0x8] sm:$0xf]
        %v450 = vld [vmem:[%s446 + $0xc] sm:$0xf]
        %v451 = vld [vmem:[%s446 + $0x10] sm:$0xf]
        %v452 = vld [vmem:[%s446 + $0x14] sm:$0xf]
        %v453 = vld [vmem:[%s446 + $0x18] sm:$0xf]
        %v454 = vld [vmem:[%s446 + $0x1c] sm:$0xf]
        %v455 = vld [vmem:[%s446 + $0x20] sm:$0xf]
        %v456 = vld [vmem:[%s446 + $0x24] sm:$0xf]
        %v457 = vld [vmem:[%s446 + $0x28] sm:$0xf]
        %v458 = vld [vmem:[%s446 + $0x2c] sm:$0xf]
        %v459 = vld [vmem:[%s446 + $0x30] sm:$0xf]
        %v460 = vld [vmem:[%s446 + $0x34] sm:$0xf]
        %v461 = vld [vmem:[%s446 + $0x38] sm:$0xf]
        %v462 = vld [vmem:[%s446 + $0x3c] sm:$0xf]
        %s463 = smul.addr %s443, 4
        %s464 = scalar_lea.vmem %s340, %s463 [#allocation2]
        %v465 = vld [vmem:[%s464] sm:$0xf]
        %v466 = vld [vmem:[%s464 + $0x4] sm:$0xf]
        %v467 = vld [vmem:[%s464 + $0x8] sm:$0xf]
        %v468 = vld [vmem:[%s464 + $0xc] sm:$0xf]
        %v469 = vld [vmem:[%s464 + $0x10] sm:$0xf]
        %v470 = vld [vmem:[%s464 + $0x14] sm:$0xf]
        %v471 = vld [vmem:[%s464 + $0x18] sm:$0xf]
        %v472 = vld [vmem:[%s464 + $0x1c] sm:$0xf]
        %v473 = vld [vmem:[%s464 + $0x20] sm:$0xf]
        %v474 = vld [vmem:[%s464 + $0x24] sm:$0xf]
        %v475 = vld [vmem:[%s464 + $0x28] sm:$0xf]
        %v476 = vld [vmem:[%s464 + $0x2c] sm:$0xf]
        %v477 = vld [vmem:[%s464 + $0x30] sm:$0xf]
        %v478 = vld [vmem:[%s464 + $0x34] sm:$0xf]
        %v479 = vld [vmem:[%s464 + $0x38] sm:$0xf]
        %v480 = vld [vmem:[%s464 + $0x3c] sm:$0xf]
        %v481 = vld [vmem:[%s3] sm:$0xf]
        %v482 = vld [vmem:[%s3 + $0x4] sm:$0xf]
        %v483 = vld [vmem:[%s3 + $0x8] sm:$0xf]
        %v484 = vld [vmem:[%s3 + $0xc] sm:$0xf]
        %v485 = vld [vmem:[%s3 + $0x10] sm:$0xf]
        %v486 = vld [vmem:[%s3 + $0x14] sm:$0xf]
        %v487 = vld [vmem:[%s3 + $0x18] sm:$0xf]
        %v488 = vld [vmem:[%s3 + $0x1c] sm:$0xf]
        %v489 = vld [vmem:[%s3 + $0x20] sm:$0xf]
        %v490 = vld [vmem:[%s3 + $0x24] sm:$0xf]
        %v491 = vld [vmem:[%s3 + $0x28] sm:$0xf]
        %v492 = vld [vmem:[%s3 + $0x2c] sm:$0xf]
        %v493 = vld [vmem:[%s3 + $0x30] sm:$0xf]
        %v494 = vld [vmem:[%s3 + $0x34] sm:$0xf]
        %v495 = vld [vmem:[%s3 + $0x38] sm:$0xf]
        %v496 = vld [vmem:[%s3 + $0x3c] sm:$0xf]
        %v513 = vunpack.c.l.b16 %v481
        %v514 = vunpack.c.l.b16 %v482
        %v515 = vunpack.c.l.b16 %v483
        %v516 = vunpack.c.l.b16 %v484
        %v517 = vunpack.c.l.b16 %v485
        %v518 = vunpack.c.l.b16 %v486
        %v519 = vunpack.c.l.b16 %v487
        %v520 = vunpack.c.l.b16 %v488
        %v521 = vunpack.c.l.b16 %v489
        %v522 = vunpack.c.l.b16 %v490
        %v523 = vunpack.c.l.b16 %v491
        %v524 = vunpack.c.l.b16 %v492
        %v525 = vunpack.c.l.b16 %v493
        %v526 = vunpack.c.l.b16 %v494
        %v527 = vunpack.c.l.b16 %v495
        %v528 = vunpack.c.l.b16 %v496
        %v529 = vpack.c.b16 %v514, %v513
        %v530 = vpack.c.b16 %v516, %v515
        %v531 = vpack.c.b16 %v518, %v517
        %v532 = vpack.c.b16 %v520, %v519
        %v533 = vpack.c.b16 %v522, %v521
        %v534 = vpack.c.b16 %v524, %v523
        %v535 = vpack.c.b16 %v526, %v525
        %v536 = vpack.c.b16 %v528, %v527
        %545 = vxpose.xlu0.c.b16.start [1/8] %v529, 128
        %546 = vxpose.xlu0.c.b16.cont [2/8] %v530, 128
        %547 = vxpose.xlu0.c.b16.cont [3/8] %v531, 128
        %548 = vxpose.xlu0.c.b16.cont [4/8] %v532, 128
        %549 = vxpose.xlu0.c.b16.cont [5/8] %v533, 128
        %550 = vxpose.xlu0.c.b16.cont [6/8] %v534, 128
        %551 = vxpose.xlu0.c.b16.cont [7/8] %v535, 128
        %552 = vxpose.xlu0.c.b16.end [8/8] %v536, 128
        %v553 = vpop.trf.xlu0
        %v554 = vpop.trf.xlu0
        %v555 = vpop.trf.xlu0
        %v556 = vpop.trf.xlu0
        %v557 = vpop.trf.xlu0
        %v558 = vpop.trf.xlu0
        %v559 = vpop.trf.xlu0
        %v560 = vpop.trf.xlu0
        %v577 = vunpack.c.l.b16 %v411
        %v578 = vunpack.c.l.b16 %v412
        %v579 = vunpack.c.l.b16 %v413
        %v580 = vunpack.c.l.b16 %v414
        %v581 = vunpack.c.l.b16 %v415
        %v582 = vunpack.c.l.b16 %v416
        %v583 = vunpack.c.l.b16 %v417
        %v584 = vunpack.c.l.b16 %v418
        %v585 = vunpack.c.l.b16 %v419
        %v586 = vunpack.c.l.b16 %v420
        %v587 = vunpack.c.l.b16 %v421
        %v588 = vunpack.c.l.b16 %v422
        %v589 = vunpack.c.l.b16 %v423
        %v590 = vunpack.c.l.b16 %v424
        %v591 = vunpack.c.l.b16 %v425
        %v592 = vunpack.c.l.b16 %v426
        %v593 = vpack.c.b16 %v578, %v577
        %v594 = vpack.c.b16 %v580, %v579
        %v595 = vpack.c.b16 %v582, %v581
        %v596 = vpack.c.b16 %v584, %v583
        %v597 = vpack.c.b16 %v586, %v585
        %v598 = vpack.c.b16 %v588, %v587
        %v599 = vpack.c.b16 %v590, %v589
        %v600 = vpack.c.b16 %v592, %v591
        %609 = vmatprep.subr.bf16.mxu0 0
        %610 = vmatpush1.bf16.xpose.msra.mxu0 %v600
        %611 = vmatprep.subr.bf16.mxu0 0
        %612 = vmatpush1.bf16.xpose.msra.mxu0 %v599
        %613 = vmatprep.subr.bf16.mxu0 0
        %614 = vmatpush1.bf16.xpose.msra.mxu0 %v598
        %615 = vmatprep.subr.bf16.mxu0 0
        %616 = vmatpush1.bf16.xpose.msra.mxu0 %v597
        %617 = vmatprep.subr.bf16.mxu0 0
        %618 = vmatpush1.bf16.xpose.msra.mxu0 %v596
        %619 = vmatprep.subr.bf16.mxu0 0
        %620 = vmatpush1.bf16.xpose.msra.mxu0 %v595
        %621 = vmatprep.subr.bf16.mxu0 0
        %622 = vmatpush1.bf16.xpose.msra.mxu0 %v594
        %623 = vmatprep.subr.bf16.mxu0 0
        %624 = vmatpush1.bf16.xpose.msra.mxu0 %v593
        %625 = vmatprep.subr.bf16.mxu0 0
        %626 = vmatpush2.bf16.xpose.msra.mxu0 0
        %627 = vmatprep.subr.bf16.mxu0 0
        %628 = vmatpush2.bf16.xpose.msra.mxu0 0
        %629 = vmatprep.subr.bf16.mxu0 0
        %630 = vmatpush2.bf16.xpose.msra.mxu0 0
        %631 = vmatprep.subr.bf16.mxu0 0
        %632 = vmatpush2.bf16.xpose.msra.mxu0 0
        %633 = vmatprep.subr.bf16.mxu0 0
        %634 = vmatpush2.bf16.xpose.msra.mxu0 0
        %635 = vmatprep.subr.bf16.mxu0 0
        %636 = vmatpush2.bf16.xpose.msra.mxu0 0
        %637 = vmatprep.subr.bf16.mxu0 0
        %638 = vmatpush2.bf16.xpose.msra.mxu0 0
        %639 = vmatprep.subr.bf16.mxu0 0
        %640 = vmatpush2.bf16.xpose.msra.mxu0 0
        %641 = vmatprep.mubr.bf16.mxu0 0
        %642 = vmatmul.mubr.bf16.gmra.mxu0 %v553
        %v643 = vpop.f32.mrf.mxu0
        %v644 = vadd.f32 0.0, %v643
        %v645 = vpop.f32.mrf.mxu0
        %v646 = vpop.f32.mrf.mxu0
        %v647 = vpop.f32.mrf.mxu0
        %648 = vdwg.mxu0
        %v649 = vld [vmem:[%s4] sm:$0xf]
        %v650 = vld [vmem:[%s4 + $0x4] sm:$0xf]
        %v651 = vld [vmem:[%s4 + $0x8] sm:$0xf]
        %v652 = vld [vmem:[%s4 + $0xc] sm:$0xf]
        %v653 = vld [vmem:[%s4 + $0x10] sm:$0xf]
        %v654 = vld [vmem:[%s4 + $0x14] sm:$0xf]
        %v655 = vld [vmem:[%s4 + $0x18] sm:$0xf]
        %v656 = vld [vmem:[%s4 + $0x1c] sm:$0xf]
        %v657 = vld [vmem:[%s4 + $0x20] sm:$0xf]
        %v658 = vld [vmem:[%s4 + $0x24] sm:$0xf]
        %v659 = vld [vmem:[%s4 + $0x28] sm:$0xf]
        %v660 = vld [vmem:[%s4 + $0x2c] sm:$0xf]
        %v661 = vld [vmem:[%s4 + $0x30] sm:$0xf]
        %v662 = vld [vmem:[%s4 + $0x34] sm:$0xf]
        %v663 = vld [vmem:[%s4 + $0x38] sm:$0xf]
        %v664 = vld [vmem:[%s4 + $0x3c] sm:$0xf]
        %v665 = vld [vmem:[%s5] sm:$0x1]
        %v667 = vlaneseq
        %v668 = vshrl.u32 %v667, 7
        %v669 = vsub.s32 0, %v668
        %v670 = vrot.slane %v665, %v669
        %v688 = vunpack.c.l.b16 %v465
        %v689 = vunpack.c.l.b16 %v466
        %v690 = vunpack.c.l.b16 %v467
        %v691 = vunpack.c.l.b16 %v468
        %v692 = vunpack.c.l.b16 %v469
        %v693 = vunpack.c.l.b16 %v470
        %v694 = vunpack.c.l.b16 %v471
        %v695 = vunpack.c.l.b16 %v472
        %v696 = vunpack.c.l.b16 %v473
        %v697 = vunpack.c.l.b16 %v474
        %v698 = vunpack.c.l.b16 %v475
        %v699 = vunpack.c.l.b16 %v476
        %v700 = vunpack.c.l.b16 %v477
        %v701 = vunpack.c.l.b16 %v478
        %v702 = vunpack.c.l.b16 %v479
        %v703 = vunpack.c.l.b16 %v480
        %v704 = vpack.c.b16 %v689, %v688
        %v705 = vpack.c.b16 %v691, %v690
        %v706 = vpack.c.b16 %v693, %v692
        %v707 = vpack.c.b16 %v695, %v694
        %v708 = vpack.c.b16 %v697, %v696
        %v709 = vpack.c.b16 %v699, %v698
        %v710 = vpack.c.b16 %v701, %v700
        %v711 = vpack.c.b16 %v703, %v702
        %v736 = vunpack.c.l.b16 %v649
        %v737 = vunpack.c.l.b16 %v650
        %v738 = vunpack.c.l.b16 %v651
        %v739 = vunpack.c.l.b16 %v652
        %v740 = vunpack.c.l.b16 %v653
        %v741 = vunpack.c.l.b16 %v654
        %v742 = vunpack.c.l.b16 %v655
        %v743 = vunpack.c.l.b16 %v656
        %v744 = vunpack.c.l.b16 %v657
        %v745 = vunpack.c.l.b16 %v658
        %v746 = vunpack.c.l.b16 %v659
        %v747 = vunpack.c.l.b16 %v660
        %v748 = vunpack.c.l.b16 %v661
        %v749 = vunpack.c.l.b16 %v662
        %v750 = vunpack.c.l.b16 %v663
        %v751 = vunpack.c.l.b16 %v664
        %v752 = vpack.c.b16 %v737, %v736
        %v753 = vpack.c.b16 %v739, %v738
        %v754 = vpack.c.b16 %v741, %v740
        %v755 = vpack.c.b16 %v743, %v742
        %v756 = vpack.c.b16 %v745, %v744
        %v757 = vpack.c.b16 %v747, %v746
        %v758 = vpack.c.b16 %v749, %v748
        %v759 = vpack.c.b16 %v751, %v750
        %768 = vmatprep.subr.bf16.mxu0 0
        %769 = vmatpush1.bf16.msra.mxu0 %v759
        %770 = vmatprep.subr.bf16.mxu0 0
        %771 = vmatpush1.bf16.msra.mxu0 %v758
        %772 = vmatprep.subr.bf16.mxu0 0
        %773 = vmatpush1.bf16.msra.mxu0 %v757
        %774 = vmatprep.subr.bf16.mxu0 0
        %775 = vmatpush1.bf16.msra.mxu0 %v756
        %776 = vmatprep.subr.bf16.mxu0 0
        %777 = vmatpush1.bf16.msra.mxu0 %v755
        %778 = vmatprep.subr.bf16.mxu0 0
        %779 = vmatpush1.bf16.msra.mxu0 %v754
        %780 = vmatprep.subr.bf16.mxu0 0
        %781 = vmatpush1.bf16.msra.mxu0 %v753
        %782 = vmatprep.subr.bf16.mxu0 0
        %783 = vmatpush1.bf16.msra.mxu0 %v752
        %784 = vmatprep.subr.bf16.mxu0 0
        %785 = vmatpush2.bf16.msra.mxu0 0
        %786 = vmatprep.subr.bf16.mxu0 0
        %787 = vmatpush2.bf16.msra.mxu0 0
        %788 = vmatprep.subr.bf16.mxu0 0
        %789 = vmatpush2.bf16.msra.mxu0 0
        %790 = vmatprep.subr.bf16.mxu0 0
        %791 = vmatpush2.bf16.msra.mxu0 0
        %792 = vmatprep.subr.bf16.mxu0 0
        %793 = vmatpush2.bf16.msra.mxu0 0
        %794 = vmatprep.subr.bf16.mxu0 0
        %795 = vmatpush2.bf16.msra.mxu0 0
        %796 = vmatprep.subr.bf16.mxu0 0
        %797 = vmatpush2.bf16.msra.mxu0 0
        %798 = vmatprep.subr.bf16.mxu0 0
        %799 = vmatpush2.bf16.msra.mxu0 0
        %800 = vmatprep.mubr.bf16.mxu0 0
        %801 = vmatmul.mubr.bf16.gmra.mxu0 %v704
        %v802 = vpop.f32.mrf.mxu0
        %v803 = vadd.f32 %v670, %v802
        %v804 = vpop.f32.mrf.mxu0
        %v805 = vpop.f32.mrf.mxu0
        %v806 = vadd.f32 %v670, %v805
        %v807 = vpop.f32.mrf.mxu0
        %808 = vmatprep.mubr.bf16.mxu0 0
        %809 = vmatmul.mubr.bf16.gmra.mxu0 %v705
        %v810 = vpop.f32.mrf.mxu0
        %v811 = vadd.f32 %v670, %v810
        %v812 = vpop.f32.mrf.mxu0
        %v813 = vpop.f32.mrf.mxu0
        %v814 = vadd.f32 %v670, %v813
        %v815 = vpop.f32.mrf.mxu0
        %816 = vmatprep.mubr.bf16.mxu0 0
        %817 = vmatmul.mubr.bf16.gmra.mxu0 %v706
        %v818 = vpop.f32.mrf.mxu0
        %v819 = vadd.f32 %v670, %v818
        %v820 = vpop.f32.mrf.mxu0
        %v821 = vpop.f32.mrf.mxu0
        %v822 = vadd.f32 %v670, %v821
        %v823 = vpop.f32.mrf.mxu0
        %824 = vmatprep.mubr.bf16.mxu0 0
        %825 = vmatmul.mubr.bf16.gmra.mxu0 %v707
        %v826 = vpop.f32.mrf.mxu0
        %v827 = vadd.f32 %v670, %v826
        %v828 = vpop.f32.mrf.mxu0
        %v829 = vpop.f32.mrf.mxu0
        %v830 = vadd.f32 %v670, %v829
        %v831 = vpop.f32.mrf.mxu0
        %832 = vmatprep.mubr.bf16.mxu0 0
        %833 = vmatmul.mubr.bf16.gmra.mxu0 %v708
        %v834 = vpop.f32.mrf.mxu0
        %v835 = vadd.f32 %v670, %v834
        %v836 = vpop.f32.mrf.mxu0
        %v837 = vpop.f32.mrf.mxu0
        %v838 = vadd.f32 %v670, %v837
        %v839 = vpop.f32.mrf.mxu0
        %840 = vmatprep.mubr.bf16.mxu0 0
        %841 = vmatmul.mubr.bf16.gmra.mxu0 %v709
        %v842 = vpop.f32.mrf.mxu0
        %v843 = vadd.f32 %v670, %v842
        %v844 = vpop.f32.mrf.mxu0
        %v845 = vpop.f32.mrf.mxu0
        %v846 = vadd.f32 %v670, %v845
        %v847 = vpop.f32.mrf.mxu0
        %848 = vmatprep.mubr.bf16.mxu0 0
        %849 = vmatmul.mubr.bf16.gmra.mxu0 %v710
        %v850 = vpop.f32.mrf.mxu0
        %v851 = vadd.f32 %v670, %v850
        %v852 = vpop.f32.mrf.mxu0
        %v853 = vpop.f32.mrf.mxu0
        %v854 = vadd.f32 %v670, %v853
        %v855 = vpop.f32.mrf.mxu0
        %856 = vmatprep.mubr.bf16.mxu0 0
        %857 = vmatmul.mubr.bf16.gmra.mxu0 %v711
        %v858 = vpop.f32.mrf.mxu0
        %v859 = vadd.f32 %v670, %v858
        %v860 = vpop.f32.mrf.mxu0
        %v861 = vpop.f32.mrf.mxu0
        %v862 = vadd.f32 %v670, %v861
        %v863 = vpop.f32.mrf.mxu0
        %864 = vdwg.mxu0
        %v865 = vld [vmem:[%s2] sm:$0xff]
        %v866 = vld [vmem:[%s2 + $0x8] sm:$0xff]
        %v867 = vld [vmem:[%s2 + $0x10] sm:$0xff]
        %v868 = vld [vmem:[%s2 + $0x18] sm:$0xff]
        %v869 = vld [vmem:[%s2 + $0x20] sm:$0xff]
        %v870 = vld [vmem:[%s2 + $0x28] sm:$0xff]
        %v871 = vld [vmem:[%s2 + $0x30] sm:$0xff]
        %v872 = vld [vmem:[%s2 + $0x38] sm:$0xff]
        %v873 = vld [vmem:[%s2 + $0x40] sm:$0xff]
        %v874 = vld [vmem:[%s2 + $0x48] sm:$0xff]
        %v875 = vld [vmem:[%s2 + $0x50] sm:$0xff]
        %v876 = vld [vmem:[%s2 + $0x58] sm:$0xff]
        %v877 = vld [vmem:[%s2 + $0x60] sm:$0xff]
        %v878 = vld [vmem:[%s2 + $0x68] sm:$0xff]
        %v879 = vld [vmem:[%s2 + $0x70] sm:$0xff]
        %v880 = vld [vmem:[%s2 + $0x78] sm:$0xff]
        %v881 = vld [vmem:[%s2 + $0x80] sm:$0xff]
        %v882 = vld [vmem:[%s2 + $0x88] sm:$0xff]
        %v883 = vld [vmem:[%s2 + $0x90] sm:$0xff]
        %v884 = vld [vmem:[%s2 + $0x98] sm:$0xff]
        %v885 = vld [vmem:[%s2 + $0xa0] sm:$0xff]
        %v886 = vld [vmem:[%s2 + $0xa8] sm:$0xff]
        %v887 = vld [vmem:[%s2 + $0xb0] sm:$0xff]
        %v888 = vld [vmem:[%s2 + $0xb8] sm:$0xff]
        %v889 = vld [vmem:[%s2 + $0xc0] sm:$0xff]
        %v890 = vld [vmem:[%s2 + $0xc8] sm:$0xff]
        %v891 = vld [vmem:[%s2 + $0xd0] sm:$0xff]
        %v892 = vld [vmem:[%s2 + $0xd8] sm:$0xff]
        %v893 = vld [vmem:[%s2 + $0xe0] sm:$0xff]
        %v894 = vld [vmem:[%s2 + $0xe8] sm:$0xff]
        %v895 = vld [vmem:[%s2 + $0xf0] sm:$0xff]
        %v896 = vld [vmem:[%s2 + $0xf8] sm:$0xff]
        %v913 = vunpack.c.l.b16 %v447
        %v914 = vunpack.c.l.b16 %v448
        %v915 = vunpack.c.l.b16 %v449
        %v916 = vunpack.c.l.b16 %v450
        %v917 = vunpack.c.l.b16 %v451
        %v918 = vunpack.c.l.b16 %v452
        %v919 = vunpack.c.l.b16 %v453
        %v920 = vunpack.c.l.b16 %v454
        %v921 = vunpack.c.l.b16 %v455
        %v922 = vunpack.c.l.b16 %v456
        %v923 = vunpack.c.l.b16 %v457
        %v924 = vunpack.c.l.b16 %v458
        %v925 = vunpack.c.l.b16 %v459
        %v926 = vunpack.c.l.b16 %v460
        %v927 = vunpack.c.l.b16 %v461
        %v928 = vunpack.c.l.b16 %v462
        %v929 = vpack.c.b16 %v914, %v913
        %v930 = vpack.c.b16 %v916, %v915
        %v931 = vpack.c.b16 %v918, %v917
        %v932 = vpack.c.b16 %v920, %v919
        %v933 = vpack.c.b16 %v922, %v921
        %v934 = vpack.c.b16 %v924, %v923
        %v935 = vpack.c.b16 %v926, %v925
        %v936 = vpack.c.b16 %v928, %v927
        %v977 = vunpack.c.l.b16 %v865
        %v978 = vunpack.c.h.b16 %v865
        %v979 = vunpack.c.l.b16 %v866
        %v980 = vunpack.c.h.b16 %v866
        %v981 = vunpack.c.l.b16 %v867
        %v982 = vunpack.c.h.b16 %v867
        %v983 = vunpack.c.l.b16 %v868
        %v984 = vunpack.c.h.b16 %v868
        %v985 = vunpack.c.l.b16 %v869
        %v986 = vunpack.c.h.b16 %v869
        %v987 = vunpack.c.l.b16 %v870
        %v988 = vunpack.c.h.b16 %v870
        %v989 = vunpack.c.l.b16 %v871
        %v990 = vunpack.c.h.b16 %v871
        %v991 = vunpack.c.l.b16 %v872
        %v992 = vunpack.c.h.b16 %v872
        %v993 = vunpack.c.l.b16 %v873
        %v994 = vunpack.c.h.b16 %v873
        %v995 = vunpack.c.l.b16 %v874
        %v996 = vunpack.c.h.b16 %v874
        %v997 = vunpack.c.l.b16 %v875
        %v998 = vunpack.c.h.b16 %v875
        %v999 = vunpack.c.l.b16 %v876
        %v1000 = vunpack.c.h.b16 %v876
        %v1001 = vunpack.c.l.b16 %v877
        %v1002 = vunpack.c.h.b16 %v877
        %v1003 = vunpack.c.l.b16 %v878
        %v1004 = vunpack.c.h.b16 %v878
        %v1005 = vunpack.c.l.b16 %v879
        %v1006 = vunpack.c.h.b16 %v879
        %v1007 = vunpack.c.l.b16 %v880
        %v1008 = vunpack.c.h.b16 %v880
        %v1009 = vunpack.c.l.b16 %v881
        %v1010 = vunpack.c.h.b16 %v881
        %v1011 = vunpack.c.l.b16 %v882
        %v1012 = vunpack.c.h.b16 %v882
        %v1013 = vunpack.c.l.b16 %v883
        %v1014 = vunpack.c.h.b16 %v883
        %v1015 = vunpack.c.l.b16 %v884
        %v1016 = vunpack.c.h.b16 %v884
        %v1017 = vunpack.c.l.b16 %v885
        %v1018 = vunpack.c.h.b16 %v885
        %v1019 = vunpack.c.l.b16 %v886
        %v1020 = vunpack.c.h.b16 %v886
        %v1021 = vunpack.c.l.b16 %v887
        %v1022 = vunpack.c.h.b16 %v887
        %v1023 = vunpack.c.l.b16 %v888
        %v1024 = vunpack.c.h.b16 %v888
        %v1025 = vunpack.c.l.b16 %v889
        %v1026 = vunpack.c.h.b16 %v889
        %v1027 = vunpack.c.l.b16 %v890
        %v1028 = vunpack.c.h.b16 %v890
        %v1029 = vunpack.c.l.b16 %v891
        %v1030 = vunpack.c.h.b16 %v891
        %v1031 = vunpack.c.l.b16 %v892
        %v1032 = vunpack.c.h.b16 %v892
        %v1033 = vunpack.c.l.b16 %v893
        %v1034 = vunpack.c.h.b16 %v893
        %v1035 = vunpack.c.l.b16 %v894
        %v1036 = vunpack.c.h.b16 %v894
        %v1037 = vunpack.c.l.b16 %v895
        %v1038 = vunpack.c.h.b16 %v895
        %v1039 = vunpack.c.l.b16 %v896
        %v1040 = vunpack.c.h.b16 %v896
        %v1041 = vpack.c.b16 %v981, %v977
        %v1042 = vpack.c.b16 %v982, %v978
        %v1043 = vpack.c.b16 %v983, %v979
        %v1044 = vpack.c.b16 %v984, %v980
        %v1045 = vpack.c.b16 %v989, %v985
        %v1046 = vpack.c.b16 %v990, %v986
        %v1047 = vpack.c.b16 %v991, %v987
        %v1048 = vpack.c.b16 %v992, %v988
        %v1049 = vpack.c.b16 %v997, %v993
        %v1050 = vpack.c.b16 %v998, %v994
        %v1051 = vpack.c.b16 %v999, %v995
        %v1052 = vpack.c.b16 %v1000, %v996
        %v1053 = vpack.c.b16 %v1005, %v1001
        %v1054 = vpack.c.b16 %v1006, %v1002
        %v1055 = vpack.c.b16 %v1007, %v1003
        %v1056 = vpack.c.b16 %v1008, %v1004
        %v1057 = vpack.c.b16 %v1013, %v1009
        %v1058 = vpack.c.b16 %v1014, %v1010
        %v1059 = vpack.c.b16 %v1015, %v1011
        %v1060 = vpack.c.b16 %v1016, %v1012
        %v1061 = vpack.c.b16 %v1021, %v1017
        %v1062 = vpack.c.b16 %v1022, %v1018
        %v1063 = vpack.c.b16 %v1023, %v1019
        %v1064 = vpack.c.b16 %v1024, %v1020
        %v1065 = vpack.c.b16 %v1029, %v1025
        %v1066 = vpack.c.b16 %v1030, %v1026
        %v1067 = vpack.c.b16 %v1031, %v1027
        %v1068 = vpack.c.b16 %v1032, %v1028
        %v1069 = vpack.c.b16 %v1037, %v1033
        %v1070 = vpack.c.b16 %v1038, %v1034
        %v1071 = vpack.c.b16 %v1039, %v1035
        %v1072 = vpack.c.b16 %v1040, %v1036
        %1105 = vmatprep.subr.bf16.mxu0 %v1070
        %1106 = vmatpush1.bf16.msra.mxu0 %v1069
        %1107 = vmatprep.subr.bf16.mxu0 %v1066
        %1108 = vmatpush1.bf16.msra.mxu0 %v1065
        %1109 = vmatprep.subr.bf16.mxu0 %v1062
        %1110 = vmatpush1.bf16.msra.mxu0 %v1061
        %1111 = vmatprep.subr.bf16.mxu0 %v1058
        %1112 = vmatpush1.bf16.msra.mxu0 %v1057
        %1113 = vmatprep.subr.bf16.mxu0 %v1054
        %1114 = vmatpush1.bf16.msra.mxu0 %v1053
        %1115 = vmatprep.subr.bf16.mxu0 %v1050
        %1116 = vmatpush1.bf16.msra.mxu0 %v1049
        %1117 = vmatprep.subr.bf16.mxu0 %v1046
        %1118 = vmatpush1.bf16.msra.mxu0 %v1045
        %1119 = vmatprep.subr.bf16.mxu0 %v1042
        %1120 = vmatpush1.bf16.msra.mxu0 %v1041
        %1121 = vmatprep.subr.bf16.mxu0 0
        %1122 = vmatpush2.bf16.msra.mxu0 0
        %1123 = vmatprep.subr.bf16.mxu0 0
        %1124 = vmatpush2.bf16.msra.mxu0 0
        %1125 = vmatprep.subr.bf16.mxu0 0
        %1126 = vmatpush2.bf16.msra.mxu0 0
        %1127 = vmatprep.subr.bf16.mxu0 0
        %1128 = vmatpush2.bf16.msra.mxu0 0
        %1129 = vmatprep.subr.bf16.mxu0 0
        %1130 = vmatpush2.bf16.msra.mxu0 0
        %1131 = vmatprep.subr.bf16.mxu0 0
        %1132 = vmatpush2.bf16.msra.mxu0 0
        %1133 = vmatprep.subr.bf16.mxu0 0
        %1134 = vmatpush2.bf16.msra.mxu0 0
        %1135 = vmatprep.subr.bf16.mxu0 0
        %1136 = vmatpush2.bf16.msra.mxu0 0
        %1137 = vmatprep.mubr.bf16.mxu0 0
        %1138 = vmatmul.mubr.bf16.gmra.mxu0 %v929
        %v1139 = vpop.f32.mrf.mxu0
        %v1140 = vadd.f32 0.0, %v1139
        %v1141 = vpop.f32.mrf.mxu0
        %v1142 = vadd.f32 0.0, %v1141
        %v1143 = vpop.f32.mrf.mxu0
        %v1144 = vadd.f32 0.0, %v1143
        %v1145 = vpop.f32.mrf.mxu0
        %v1146 = vadd.f32 0.0, %v1145
        %1147 = vmatprep.mubr.bf16.mxu0 0
        %1148 = vmatmul.mubr.bf16.gmra.mxu0 %v930
        %v1149 = vpop.f32.mrf.mxu0
        %v1150 = vadd.f32 0.0, %v1149
        %v1151 = vpop.f32.mrf.mxu0
        %v1152 = vadd.f32 0.0, %v1151
        %v1153 = vpop.f32.mrf.mxu0
        %v1154 = vadd.f32 0.0, %v1153
        %v1155 = vpop.f32.mrf.mxu0
        %v1156 = vadd.f32 0.0, %v1155
        %1157 = vmatprep.mubr.bf16.mxu0 0
        %1158 = vmatmul.mubr.bf16.gmra.mxu0 %v931
        %v1159 = vpop.f32.mrf.mxu0
        %v1160 = vadd.f32 0.0, %v1159
        %v1161 = vpop.f32.mrf.mxu0
        %v1162 = vadd.f32 0.0, %v1161
        %v1163 = vpop.f32.mrf.mxu0
        %v1164 = vadd.f32 0.0, %v1163
        %v1165 = vpop.f32.mrf.mxu0
        %v1166 = vadd.f32 0.0, %v1165
        %1167 = vmatprep.mubr.bf16.mxu0 0
        %1168 = vmatmul.mubr.bf16.gmra.mxu0 %v932
        %v1169 = vpop.f32.mrf.mxu0
        %v1170 = vadd.f32 0.0, %v1169
        %v1171 = vpop.f32.mrf.mxu0
        %v1172 = vadd.f32 0.0, %v1171
        %v1173 = vpop.f32.mrf.mxu0
        %v1174 = vadd.f32 0.0, %v1173
        %v1175 = vpop.f32.mrf.mxu0
        %v1176 = vadd.f32 0.0, %v1175
        %1177 = vmatprep.mubr.bf16.mxu0 0
        %1178 = vmatmul.mubr.bf16.gmra.mxu0 %v933
        %v1179 = vpop.f32.mrf.mxu0
        %v1180 = vadd.f32 0.0, %v1179
        %v1181 = vpop.f32.mrf.mxu0
        %v1182 = vadd.f32 0.0, %v1181
        %v1183 = vpop.f32.mrf.mxu0
        %v1184 = vadd.f32 0.0, %v1183
        %v1185 = vpop.f32.mrf.mxu0
        %v1186 = vadd.f32 0.0, %v1185
        %1187 = vmatprep.mubr.bf16.mxu0 0
        %1188 = vmatmul.mubr.bf16.gmra.mxu0 %v934
        %v1189 = vpop.f32.mrf.mxu0
        %v1190 = vadd.f32 0.0, %v1189
        %v1191 = vpop.f32.mrf.mxu0
        %v1192 = vadd.f32 0.0, %v1191
        %v1193 = vpop.f32.mrf.mxu0
        %v1194 = vadd.f32 0.0, %v1193
        %v1195 = vpop.f32.mrf.mxu0
        %v1196 = vadd.f32 0.0, %v1195
        %1197 = vmatprep.mubr.bf16.mxu0 0
        %1198 = vmatmul.mubr.bf16.gmra.mxu0 %v935
        %v1199 = vpop.f32.mrf.mxu0
        %v1200 = vadd.f32 0.0, %v1199
        %v1201 = vpop.f32.mrf.mxu0
        %v1202 = vadd.f32 0.0, %v1201
        %v1203 = vpop.f32.mrf.mxu0
        %v1204 = vadd.f32 0.0, %v1203
        %v1205 = vpop.f32.mrf.mxu0
        %v1206 = vadd.f32 0.0, %v1205
        %1207 = vmatprep.mubr.bf16.mxu0 0
        %1208 = vmatmul.mubr.bf16.gmra.mxu0 %v936
        %v1209 = vpop.f32.mrf.mxu0
        %v1210 = vadd.f32 0.0, %v1209
        %v1211 = vpop.f32.mrf.mxu0
        %v1212 = vadd.f32 0.0, %v1211
        %v1213 = vpop.f32.mrf.mxu0
        %v1214 = vadd.f32 0.0, %v1213
        %v1215 = vpop.f32.mrf.mxu0
        %v1216 = vadd.f32 0.0, %v1215
        %1217 = vdwg.mxu0
        %1218 = vmatprep.subr.bf16.mxu0 %v1072
        %1219 = vmatpush1.bf16.msra.mxu0 %v1071
        %1220 = vmatprep.subr.bf16.mxu0 %v1068
        %1221 = vmatpush1.bf16.msra.mxu0 %v1067
        %1222 = vmatprep.subr.bf16.mxu0 %v1064
        %1223 = vmatpush1.bf16.msra.mxu0 %v1063
        %1224 = vmatprep.subr.bf16.mxu0 %v1060
        %1225 = vmatpush1.bf16.msra.mxu0 %v1059
        %1226 = vmatprep.subr.bf16.mxu0 %v1056
        %1227 = vmatpush1.bf16.msra.mxu0 %v1055
        %1228 = vmatprep.subr.bf16.mxu0 %v1052
        %1229 = vmatpush1.bf16.msra.mxu0 %v1051
        %1230 = vmatprep.subr.bf16.mxu0 %v1048
        %1231 = vmatpush1.bf16.msra.mxu0 %v1047
        %1232 = vmatprep.subr.bf16.mxu0 %v1044
        %1233 = vmatpush1.bf16.msra.mxu0 %v1043
        %1234 = vmatprep.subr.bf16.mxu0 0
        %1235 = vmatpush2.bf16.msra.mxu0 0
        %1236 = vmatprep.subr.bf16.mxu0 0
        %1237 = vmatpush2.bf16.msra.mxu0 0
        %1238 = vmatprep.subr.bf16.mxu0 0
        %1239 = vmatpush2.bf16.msra.mxu0 0
        %1240 = vmatprep.subr.bf16.mxu0 0
        %1241 = vmatpush2.bf16.msra.mxu0 0
        %1242 = vmatprep.subr.bf16.mxu0 0
        %1243 = vmatpush2.bf16.msra.mxu0 0
        %1244 = vmatprep.subr.bf16.mxu0 0
        %1245 = vmatpush2.bf16.msra.mxu0 0
        %1246 = vmatprep.subr.bf16.mxu0 0
        %1247 = vmatpush2.bf16.msra.mxu0 0
        %1248 = vmatprep.subr.bf16.mxu0 0
        %1249 = vmatpush2.bf16.msra.mxu0 0
        %1250 = vmatprep.mubr.bf16.mxu0 0
        %1251 = vmatmul.mubr.bf16.gmra.mxu0 %v929
        %v1252 = vpop.f32.mrf.mxu0
        %v1253 = vadd.f32 0.0, %v1252
        %v1254 = vpop.f32.mrf.mxu0
        %v1255 = vadd.f32 0.0, %v1254
        %v1256 = vpop.f32.mrf.mxu0
        %v1257 = vadd.f32 0.0, %v1256
        %v1258 = vpop.f32.mrf.mxu0
        %v1259 = vadd.f32 0.0, %v1258
        %1260 = vmatprep.mubr.bf16.mxu0 0
        %1261 = vmatmul.mubr.bf16.gmra.mxu0 %v930
        %v1262 = vpop.f32.mrf.mxu0
        %v1263 = vadd.f32 0.0, %v1262
        %v1264 = vpop.f32.mrf.mxu0
        %v1265 = vadd.f32 0.0, %v1264
        %v1266 = vpop.f32.mrf.mxu0
        %v1267 = vadd.f32 0.0, %v1266
        %v1268 = vpop.f32.mrf.mxu0
        %v1269 = vadd.f32 0.0, %v1268
        %1270 = vmatprep.mubr.bf16.mxu0 0
        %1271 = vmatmul.mubr.bf16.gmra.mxu0 %v931
        %v1272 = vpop.f32.mrf.mxu0
        %v1273 = vadd.f32 0.0, %v1272
        %v1274 = vpop.f32.mrf.mxu0
        %v1275 = vadd.f32 0.0, %v1274
        %v1276 = vpop.f32.mrf.mxu0
        %v1277 = vadd.f32 0.0, %v1276
        %v1278 = vpop.f32.mrf.mxu0
        %v1279 = vadd.f32 0.0, %v1278
        %1280 = vmatprep.mubr.bf16.mxu0 0
        %1281 = vmatmul.mubr.bf16.gmra.mxu0 %v932
        %v1282 = vpop.f32.mrf.mxu0
        %v1283 = vadd.f32 0.0, %v1282
        %v1284 = vpop.f32.mrf.mxu0
        %v1285 = vadd.f32 0.0, %v1284
        %v1286 = vpop.f32.mrf.mxu0
        %v1287 = vadd.f32 0.0, %v1286
        %v1288 = vpop.f32.mrf.mxu0
        %v1289 = vadd.f32 0.0, %v1288
        %1290 = vmatprep.mubr.bf16.mxu0 0
        %1291 = vmatmul.mubr.bf16.gmra.mxu0 %v933
        %v1292 = vpop.f32.mrf.mxu0
        %v1293 = vadd.f32 0.0, %v1292
        %v1294 = vpop.f32.mrf.mxu0
        %v1295 = vadd.f32 0.0, %v1294
        %v1296 = vpop.f32.mrf.mxu0
        %v1297 = vadd.f32 0.0, %v1296
        %v1298 = vpop.f32.mrf.mxu0
        %v1299 = vadd.f32 0.0, %v1298
        %1300 = vmatprep.mubr.bf16.mxu0 0
        %1301 = vmatmul.mubr.bf16.gmra.mxu0 %v934
        %v1302 = vpop.f32.mrf.mxu0
        %v1303 = vadd.f32 0.0, %v1302
        %v1304 = vpop.f32.mrf.mxu0
        %v1305 = vadd.f32 0.0, %v1304
        %v1306 = vpop.f32.mrf.mxu0
        %v1307 = vadd.f32 0.0, %v1306
        %v1308 = vpop.f32.mrf.mxu0
        %v1309 = vadd.f32 0.0, %v1308
        %1310 = vmatprep.mubr.bf16.mxu0 0
        %1311 = vmatmul.mubr.bf16.gmra.mxu0 %v935
        %v1312 = vpop.f32.mrf.mxu0
        %v1313 = vadd.f32 0.0, %v1312
        %v1314 = vpop.f32.mrf.mxu0
        %v1315 = vadd.f32 0.0, %v1314
        %v1316 = vpop.f32.mrf.mxu0
        %v1317 = vadd.f32 0.0, %v1316
        %v1318 = vpop.f32.mrf.mxu0
        %v1319 = vadd.f32 0.0, %v1318
        %1320 = vmatprep.mubr.bf16.mxu0 0
        %1321 = vmatmul.mubr.bf16.gmra.mxu0 %v936
        %v1322 = vpop.f32.mrf.mxu0
        %v1323 = vadd.f32 0.0, %v1322
        %v1324 = vpop.f32.mrf.mxu0
        %v1325 = vadd.f32 0.0, %v1324
        %v1326 = vpop.f32.mrf.mxu0
        %v1327 = vadd.f32 0.0, %v1326
        %v1328 = vpop.f32.mrf.mxu0
        %v1329 = vadd.f32 0.0, %v1328
        %1330 = vdwg.mxu0
        %v1331 = vpack.c.bf16 %v1144, %v1140
        %v1332 = vpack.c.bf16 %v1146, %v1142
        %v1333 = vpack.c.bf16 %v1257, %v1253
        %v1334 = vpack.c.bf16 %v1259, %v1255
        %v1335 = vpack.c.bf16 %v1154, %v1150
        %v1336 = vpack.c.bf16 %v1156, %v1152
        %v1337 = vpack.c.bf16 %v1267, %v1263
        %v1338 = vpack.c.bf16 %v1269, %v1265
        %v1339 = vpack.c.bf16 %v1164, %v1160
        %v1340 = vpack.c.bf16 %v1166, %v1162
        %v1341 = vpack.c.bf16 %v1277, %v1273
        %v1342 = vpack.c.bf16 %v1279, %v1275
        %v1343 = vpack.c.bf16 %v1174, %v1170
        %v1344 = vpack.c.bf16 %v1176, %v1172
        %v1345 = vpack.c.bf16 %v1287, %v1283
        %v1346 = vpack.c.bf16 %v1289, %v1285
        %v1347 = vpack.c.bf16 %v1184, %v1180
        %v1348 = vpack.c.bf16 %v1186, %v1182
        %v1349 = vpack.c.bf16 %v1297, %v1293
        %v1350 = vpack.c.bf16 %v1299, %v1295
        %v1351 = vpack.c.bf16 %v1194, %v1190
        %v1352 = vpack.c.bf16 %v1196, %v1192
        %v1353 = vpack.c.bf16 %v1307, %v1303
        %v1354 = vpack.c.bf16 %v1309, %v1305
        %v1355 = vpack.c.bf16 %v1204, %v1200
        %v1356 = vpack.c.bf16 %v1206, %v1202
        %v1357 = vpack.c.bf16 %v1317, %v1313
        %v1358 = vpack.c.bf16 %v1319, %v1315
        %v1359 = vpack.c.bf16 %v1214, %v1210
        %v1360 = vpack.c.bf16 %v1216, %v1212
        %v1361 = vpack.c.bf16 %v1327, %v1323
        %v1362 = vpack.c.bf16 %v1329, %v1325
        %v1363 = vld [vmem:[%s403] sm:$0xff]
        %v1364 = vld [vmem:[%s403 + $0x8] sm:$0xff]
        %v1365 = vld [vmem:[%s403 + $0x10] sm:$0xff]
        %v1366 = vld [vmem:[%s403 + $0x18] sm:$0xff]
        %v1367 = vld [vmem:[%s403 + $0x20] sm:$0xff]
        %v1368 = vld [vmem:[%s403 + $0x28] sm:$0xff]
        %v1369 = vld [vmem:[%s403 + $0x30] sm:$0xff]
        %v1370 = vld [vmem:[%s403 + $0x38] sm:$0xff]
        %v1371 = vld [vmem:[%s403 + $0x40] sm:$0xff]
        %v1372 = vld [vmem:[%s403 + $0x48] sm:$0xff]
        %v1373 = vld [vmem:[%s403 + $0x50] sm:$0xff]
        %v1374 = vld [vmem:[%s403 + $0x58] sm:$0xff]
        %v1375 = vld [vmem:[%s403 + $0x60] sm:$0xff]
        %v1376 = vld [vmem:[%s403 + $0x68] sm:$0xff]
        %v1377 = vld [vmem:[%s403 + $0x70] sm:$0xff]
        %v1378 = vld [vmem:[%s403 + $0x78] sm:$0xff]
        %v1379 = vld [vmem:[%s407] sm:$0x1]
        %v1380 = vlaneseq
        %v1381 = vshrl.u32 %v1380, 7
        %v1382 = vadd.s32 %v1381, 8
        %v1383 = vadd.s32 %v1381, 16
        %v1384 = vadd.s32 %v1381, 24
        %v1385 = vadd.s32 %v1381, 32
        %v1386 = vadd.s32 %v1381, 40
        %v1387 = vadd.s32 %v1381, 48
        %v1388 = vadd.s32 %v1381, 56
        %v1389 = vadd.s32 %v1381, 64
        %v1390 = vadd.s32 %v1381, 72
        %v1391 = vadd.s32 %v1381, 80
        %v1392 = vadd.s32 %v1381, 88
        %v1393 = vadd.s32 %v1381, 96
        %v1394 = vadd.s32 %v1381, 104
        %v1395 = vadd.s32 %v1381, 112
        %v1396 = vadd.s32 %v1381, 120
        %v1397 = vstv %s410
        %v1398 = vadd.s32 %v1381, %v1397
        %v1399 = vadd.s32 %v1382, %v1397
        %v1400 = vadd.s32 %v1383, %v1397
        %v1401 = vadd.s32 %v1384, %v1397
        %v1402 = vadd.s32 %v1385, %v1397
        %v1403 = vadd.s32 %v1386, %v1397
        %v1404 = vadd.s32 %v1387, %v1397
        %v1405 = vadd.s32 %v1388, %v1397
        %v1406 = vadd.s32 %v1389, %v1397
        %v1407 = vadd.s32 %v1390, %v1397
        %v1408 = vadd.s32 %v1391, %v1397
        %v1409 = vadd.s32 %v1392, %v1397
        %v1410 = vadd.s32 %v1393, %v1397
        %v1411 = vadd.s32 %v1394, %v1397
        %v1412 = vadd.s32 %v1395, %v1397
        %v1413 = vadd.s32 %v1396, %v1397
        %v1414 = vlaneseq
        %v1415 = vand.u32 %v1414, 127
        %vm1416 = vcmp.gt.s32.totalorder %v1398, %v1415
        %vm1417 = vcmp.gt.s32.totalorder %v1399, %v1415
        %vm1418 = vcmp.gt.s32.totalorder %v1400, %v1415
        %vm1419 = vcmp.gt.s32.totalorder %v1401, %v1415
        %vm1420 = vcmp.gt.s32.totalorder %v1402, %v1415
        %vm1421 = vcmp.gt.s32.totalorder %v1403, %v1415
        %vm1422 = vcmp.gt.s32.totalorder %v1404, %v1415
        %vm1423 = vcmp.gt.s32.totalorder %v1405, %v1415
        %vm1424 = vcmp.gt.s32.totalorder %v1406, %v1415
        %vm1425 = vcmp.gt.s32.totalorder %v1407, %v1415
        %vm1426 = vcmp.gt.s32.totalorder %v1408, %v1415
        %vm1427 = vcmp.gt.s32.totalorder %v1409, %v1415
        %vm1428 = vcmp.gt.s32.totalorder %v1410, %v1415
        %vm1429 = vcmp.gt.s32.totalorder %v1411, %v1415
        %vm1430 = vcmp.gt.s32.totalorder %v1412, %v1415
        %vm1431 = vcmp.gt.s32.totalorder %v1413, %v1415
        %v1432 = vsel %vm1416, 1, 0
        %v1433 = vsel %vm1417, 1, 0
        %v1434 = vsel %vm1418, 1, 0
        %v1435 = vsel %vm1419, 1, 0
        %v1436 = vsel %vm1420, 1, 0
        %v1437 = vsel %vm1421, 1, 0
        %v1438 = vsel %vm1422, 1, 0
        %v1439 = vsel %vm1423, 1, 0
        %v1440 = vsel %vm1424, 1, 0
        %v1441 = vsel %vm1425, 1, 0
        %v1442 = vsel %vm1426, 1, 0
        %v1443 = vsel %vm1427, 1, 0
        %v1444 = vsel %vm1428, 1, 0
        %v1445 = vsel %vm1429, 1, 0
        %v1446 = vsel %vm1430, 1, 0
        %v1447 = vsel %vm1431, 1, 0
        %v1448 = vcvt.s32.f32 %v1432
        %v1449 = vcvt.s32.f32 %v1433
        %v1450 = vcvt.s32.f32 %v1434
        %v1451 = vcvt.s32.f32 %v1435
        %v1452 = vcvt.s32.f32 %v1436
        %v1453 = vcvt.s32.f32 %v1437
        %v1454 = vcvt.s32.f32 %v1438
        %v1455 = vcvt.s32.f32 %v1439
        %v1456 = vcvt.s32.f32 %v1440
        %v1457 = vcvt.s32.f32 %v1441
        %v1458 = vcvt.s32.f32 %v1442
        %v1459 = vcvt.s32.f32 %v1443
        %v1460 = vcvt.s32.f32 %v1444
        %v1461 = vcvt.s32.f32 %v1445
        %v1462 = vcvt.s32.f32 %v1446
        %v1463 = vcvt.s32.f32 %v1447
        %1465 = vset.pattern.permute.xlu0 0
        %1466 = vperm.xlu0 %1465, %v1363
        %v1467 = vpop.permute.xlu0 %1466
        %1470 = vset.pattern.permute.xlu0 0
        %1471 = vperm.xlu0 %1470, %v1364
        %v1472 = vpop.permute.xlu0 %1471
        %1475 = vset.pattern.permute.xlu0 0
        %1476 = vperm.xlu0 %1475, %v1365
        %v1477 = vpop.permute.xlu0 %1476
        %1480 = vset.pattern.permute.xlu0 0
        %1481 = vperm.xlu0 %1480, %v1366
        %v1482 = vpop.permute.xlu0 %1481
        %1485 = vset.pattern.permute.xlu0 0
        %1486 = vperm.xlu0 %1485, %v1367
        %v1487 = vpop.permute.xlu0 %1486
        %1490 = vset.pattern.permute.xlu0 0
        %1491 = vperm.xlu0 %1490, %v1368
        %v1492 = vpop.permute.xlu0 %1491
        %1495 = vset.pattern.permute.xlu0 0
        %1496 = vperm.xlu0 %1495, %v1369
        %v1497 = vpop.permute.xlu0 %1496
        %1500 = vset.pattern.permute.xlu0 0
        %1501 = vperm.xlu0 %1500, %v1370
        %v1502 = vpop.permute.xlu0 %1501
        %1505 = vset.pattern.permute.xlu0 0
        %1506 = vperm.xlu0 %1505, %v1371
        %v1507 = vpop.permute.xlu0 %1506
        %1510 = vset.pattern.permute.xlu0 0
        %1511 = vperm.xlu0 %1510, %v1372
        %v1512 = vpop.permute.xlu0 %1511
        %1515 = vset.pattern.permute.xlu0 0
        %1516 = vperm.xlu0 %1515, %v1373
        %v1517 = vpop.permute.xlu0 %1516
        %1520 = vset.pattern.permute.xlu0 0
        %1521 = vperm.xlu0 %1520, %v1374
        %v1522 = vpop.permute.xlu0 %1521
        %1525 = vset.pattern.permute.xlu0 0
        %1526 = vperm.xlu0 %1525, %v1375
        %v1527 = vpop.permute.xlu0 %1526
        %1530 = vset.pattern.permute.xlu0 0
        %1531 = vperm.xlu0 %1530, %v1376
        %v1532 = vpop.permute.xlu0 %1531
        %1535 = vset.pattern.permute.xlu0 0
        %1536 = vperm.xlu0 %1535, %v1377
        %v1537 = vpop.permute.xlu0 %1536
        %1540 = vset.pattern.permute.xlu0 0
        %1541 = vperm.xlu0 %1540, %v1378
        %v1542 = vpop.permute.xlu0 %1541
        %v1545 = vlaneseq
        %v1546 = vshrl.u32 %v1545, 7
        %v1547 = vsub.s32 0, %v1546
        %v1548 = vrot.slane %v1379, %v1547
        %v1550 = vmul.f32 %v1467, %v1548
        %v1551 = vmul.f32 %v1472, %v1548
        %v1552 = vmul.f32 %v1477, %v1548
        %v1553 = vmul.f32 %v1482, %v1548
        %v1554 = vmul.f32 %v1487, %v1548
        %v1555 = vmul.f32 %v1492, %v1548
        %v1556 = vmul.f32 %v1497, %v1548
        %v1557 = vmul.f32 %v1502, %v1548
        %v1558 = vmul.f32 %v1507, %v1548
        %v1559 = vmul.f32 %v1512, %v1548
        %v1560 = vmul.f32 %v1517, %v1548
        %v1561 = vmul.f32 %v1522, %v1548
        %v1562 = vmul.f32 %v1527, %v1548
        %v1563 = vmul.f32 %v1532, %v1548
        %v1564 = vmul.f32 %v1537, %v1548
        %v1565 = vmul.f32 %v1542, %v1548
        %v1566 = vsub.f32 1.0, %v1363
        %v1567 = vsub.f32 1.0, %v1364
        %v1568 = vsub.f32 1.0, %v1365
        %v1569 = vsub.f32 1.0, %v1366
        %v1570 = vsub.f32 1.0, %v1367
        %v1571 = vsub.f32 1.0, %v1368
        %v1572 = vsub.f32 1.0, %v1369
        %v1573 = vsub.f32 1.0, %v1370
        %v1574 = vsub.f32 1.0, %v1371
        %v1575 = vsub.f32 1.0, %v1372
        %v1576 = vsub.f32 1.0, %v1373
        %v1577 = vsub.f32 1.0, %v1374
        %v1578 = vsub.f32 1.0, %v1375
        %v1579 = vsub.f32 1.0, %v1376
        %v1580 = vsub.f32 1.0, %v1377
        %v1581 = vsub.f32 1.0, %v1378
        %v1582 = vmul.f32 %v1566, -1e+12
        %v1583 = vmul.f32 %v1567, -1e+12
        %v1584 = vmul.f32 %v1568, -1e+12
        %v1585 = vmul.f32 %v1569, -1e+12
        %v1586 = vmul.f32 %v1570, -1e+12
        %v1587 = vmul.f32 %v1571, -1e+12
        %v1588 = vmul.f32 %v1572, -1e+12
        %v1589 = vmul.f32 %v1573, -1e+12
        %v1590 = vmul.f32 %v1574, -1e+12
        %v1591 = vmul.f32 %v1575, -1e+12
        %v1592 = vmul.f32 %v1576, -1e+12
        %v1593 = vmul.f32 %v1577, -1e+12
        %v1594 = vmul.f32 %v1578, -1e+12
        %v1595 = vmul.f32 %v1579, -1e+12
        %v1596 = vmul.f32 %v1580, -1e+12
        %v1597 = vmul.f32 %v1581, -1e+12
        %1599 = vset.pattern.permute.xlu0 0
        %1600 = vperm.xlu0 %1599, %v1582
        %v1601 = vpop.permute.xlu0 %1600
        %1604 = vset.pattern.permute.xlu0 0
        %1605 = vperm.xlu0 %1604, %v1583
        %v1606 = vpop.permute.xlu0 %1605
        %1609 = vset.pattern.permute.xlu0 0
        %1610 = vperm.xlu0 %1609, %v1584
        %v1611 = vpop.permute.xlu0 %1610
        %1614 = vset.pattern.permute.xlu0 0
        %1615 = vperm.xlu0 %1614, %v1585
        %v1616 = vpop.permute.xlu0 %1615
        %1619 = vset.pattern.permute.xlu0 0
        %1620 = vperm.xlu0 %1619, %v1586
        %v1621 = vpop.permute.xlu0 %1620
        %1624 = vset.pattern.permute.xlu0 0
        %1625 = vperm.xlu0 %1624, %v1587
        %v1626 = vpop.permute.xlu0 %1625
        %1629 = vset.pattern.permute.xlu0 0
        %1630 = vperm.xlu0 %1629, %v1588
        %v1631 = vpop.permute.xlu0 %1630
        %1634 = vset.pattern.permute.xlu0 0
        %1635 = vperm.xlu0 %1634, %v1589
        %v1636 = vpop.permute.xlu0 %1635
        %1639 = vset.pattern.permute.xlu0 0
        %1640 = vperm.xlu0 %1639, %v1590
        %v1641 = vpop.permute.xlu0 %1640
        %1644 = vset.pattern.permute.xlu0 0
        %1645 = vperm.xlu0 %1644, %v1591
        %v1646 = vpop.permute.xlu0 %1645
        %1649 = vset.pattern.permute.xlu0 0
        %1650 = vperm.xlu0 %1649, %v1592
        %v1651 = vpop.permute.xlu0 %1650
        %1654 = vset.pattern.permute.xlu0 0
        %1655 = vperm.xlu0 %1654, %v1593
        %v1656 = vpop.permute.xlu0 %1655
        %1659 = vset.pattern.permute.xlu0 0
        %1660 = vperm.xlu0 %1659, %v1594
        %v1661 = vpop.permute.xlu0 %1660
        %1664 = vset.pattern.permute.xlu0 0
        %1665 = vperm.xlu0 %1664, %v1595
        %v1666 = vpop.permute.xlu0 %1665
        %1669 = vset.pattern.permute.xlu0 0
        %1670 = vperm.xlu0 %1669, %v1596
        %v1671 = vpop.permute.xlu0 %1670
        %1674 = vset.pattern.permute.xlu0 0
        %1675 = vperm.xlu0 %1674, %v1597
        %v1676 = vpop.permute.xlu0 %1675
        %v1678 = vmul.f32 %v1601, %v1548
        %v1679 = vmul.f32 %v1606, %v1548
        %v1680 = vmul.f32 %v1611, %v1548
        %v1681 = vmul.f32 %v1616, %v1548
        %v1682 = vmul.f32 %v1621, %v1548
        %v1683 = vmul.f32 %v1626, %v1548
        %v1684 = vmul.f32 %v1631, %v1548
        %v1685 = vmul.f32 %v1636, %v1548
        %v1686 = vmul.f32 %v1641, %v1548
        %v1687 = vmul.f32 %v1646, %v1548
        %v1688 = vmul.f32 %v1651, %v1548
        %v1689 = vmul.f32 %v1656, %v1548
        %v1690 = vmul.f32 %v1661, %v1548
        %v1691 = vmul.f32 %v1666, %v1548
        %v1692 = vmul.f32 %v1671, %v1548
        %v1693 = vmul.f32 %v1676, %v1548
        %v1694 = vsub.f32 1.0, %v1379
        %v1695 = vmul.f32 %v1694, -1e+12
        %v1697 = vlaneseq
        %v1698 = vshrl.u32 %v1697, 7
        %v1699 = vsub.s32 0, %v1698
        %v1700 = vrot.slane %v1695, %v1699
        %v1702 = vadd.f32 %v1678, %v1700
        %v1703 = vadd.f32 %v1679, %v1700
        %v1704 = vadd.f32 %v1680, %v1700
        %v1705 = vadd.f32 %v1681, %v1700
        %v1706 = vadd.f32 %v1682, %v1700
        %v1707 = vadd.f32 %v1683, %v1700
        %v1708 = vadd.f32 %v1684, %v1700
        %v1709 = vadd.f32 %v1685, %v1700
        %v1710 = vadd.f32 %v1686, %v1700
        %v1711 = vadd.f32 %v1687, %v1700
        %v1712 = vadd.f32 %v1688, %v1700
        %v1713 = vadd.f32 %v1689, %v1700
        %v1714 = vadd.f32 %v1690, %v1700
        %v1715 = vadd.f32 %v1691, %v1700
        %v1716 = vadd.f32 %v1692, %v1700
        %v1717 = vadd.f32 %v1693, %v1700
        %v1718 = vmul.f32 %v1448, 1e+12
        %v1719 = vmul.f32 %v1449, 1e+12
        %v1720 = vmul.f32 %v1450, 1e+12
        %v1721 = vmul.f32 %v1451, 1e+12
        %v1722 = vmul.f32 %v1452, 1e+12
        %v1723 = vmul.f32 %v1453, 1e+12
        %v1724 = vmul.f32 %v1454, 1e+12
        %v1725 = vmul.f32 %v1455, 1e+12
        %v1726 = vmul.f32 %v1456, 1e+12
        %v1727 = vmul.f32 %v1457, 1e+12
        %v1728 = vmul.f32 %v1458, 1e+12
        %v1729 = vmul.f32 %v1459, 1e+12
        %v1730 = vmul.f32 %v1460, 1e+12
        %v1731 = vmul.f32 %v1461, 1e+12
        %v1732 = vmul.f32 %v1462, 1e+12
        %v1733 = vmul.f32 %v1463, 1e+12
        %v1734 = vsub.f32 %v1702, %v1718
        %v1735 = vsub.f32 %v1703, %v1719
        %v1736 = vsub.f32 %v1704, %v1720
        %v1737 = vsub.f32 %v1705, %v1721
        %v1738 = vsub.f32 %v1706, %v1722
        %v1739 = vsub.f32 %v1707, %v1723
        %v1740 = vsub.f32 %v1708, %v1724
        %v1741 = vsub.f32 %v1709, %v1725
        %v1742 = vsub.f32 %v1710, %v1726
        %v1743 = vsub.f32 %v1711, %v1727
        %v1744 = vsub.f32 %v1712, %v1728
        %v1745 = vsub.f32 %v1713, %v1729
        %v1746 = vsub.f32 %v1714, %v1730
        %v1747 = vsub.f32 %v1715, %v1731
        %v1748 = vsub.f32 %v1716, %v1732
        %v1749 = vsub.f32 %v1717, %v1733
        %1751 = vset.pattern.permute.xlu0 0
        %1752 = vperm.xlu0 %1751, %v803
        %v1753 = vpop.permute.xlu0 %1752
        %1756 = vset.pattern.permute.xlu0 0
        %1757 = vperm.xlu0 %1756, %v806
        %v1758 = vpop.permute.xlu0 %1757
        %1761 = vset.pattern.permute.xlu0 0
        %1762 = vperm.xlu0 %1761, %v811
        %v1763 = vpop.permute.xlu0 %1762
        %1766 = vset.pattern.permute.xlu0 0
        %1767 = vperm.xlu0 %1766, %v814
        %v1768 = vpop.permute.xlu0 %1767
        %1771 = vset.pattern.permute.xlu0 0
        %1772 = vperm.xlu0 %1771, %v819
        %v1773 = vpop.permute.xlu0 %1772
        %1776 = vset.pattern.permute.xlu0 0
        %1777 = vperm.xlu0 %1776, %v822
        %v1778 = vpop.permute.xlu0 %1777
        %1781 = vset.pattern.permute.xlu0 0
        %1782 = vperm.xlu0 %1781, %v827
        %v1783 = vpop.permute.xlu0 %1782
        %1786 = vset.pattern.permute.xlu0 0
        %1787 = vperm.xlu0 %1786, %v830
        %v1788 = vpop.permute.xlu0 %1787
        %1791 = vset.pattern.permute.xlu0 0
        %1792 = vperm.xlu0 %1791, %v835
        %v1793 = vpop.permute.xlu0 %1792
        %1796 = vset.pattern.permute.xlu0 0
        %1797 = vperm.xlu0 %1796, %v838
        %v1798 = vpop.permute.xlu0 %1797
        %1801 = vset.pattern.permute.xlu0 0
        %1802 = vperm.xlu0 %1801, %v843
        %v1803 = vpop.permute.xlu0 %1802
        %1806 = vset.pattern.permute.xlu0 0
        %1807 = vperm.xlu0 %1806, %v846
        %v1808 = vpop.permute.xlu0 %1807
        %1811 = vset.pattern.permute.xlu0 0
        %1812 = vperm.xlu0 %1811, %v851
        %v1813 = vpop.permute.xlu0 %1812
        %1816 = vset.pattern.permute.xlu0 0
        %1817 = vperm.xlu0 %1816, %v854
        %v1818 = vpop.permute.xlu0 %1817
        %1821 = vset.pattern.permute.xlu0 0
        %1822 = vperm.xlu0 %1821, %v859
        %v1823 = vpop.permute.xlu0 %1822
        %1826 = vset.pattern.permute.xlu0 0
        %1827 = vperm.xlu0 %1826, %v862
        %v1828 = vpop.permute.xlu0 %1827
        %v1830 = vlaneseq
        %v1831 = vshrl.u32 %v1830, 7
        %v1832 = vsub.s32 0, %v1831
        %v1833 = vrot.slane %v644, %v1832
        %v1834 = vadd.f32 %v1753, %v1833
        %v1835 = vadd.f32 %v1758, %v1833
        %v1836 = vadd.f32 %v1763, %v1833
        %v1837 = vadd.f32 %v1768, %v1833
        %v1838 = vadd.f32 %v1773, %v1833
        %v1839 = vadd.f32 %v1778, %v1833
        %v1840 = vadd.f32 %v1783, %v1833
        %v1841 = vadd.f32 %v1788, %v1833
        %v1842 = vadd.f32 %v1793, %v1833
        %v1843 = vadd.f32 %v1798, %v1833
        %v1844 = vadd.f32 %v1803, %v1833
        %v1845 = vadd.f32 %v1808, %v1833
        %v1846 = vadd.f32 %v1813, %v1833
        %v1847 = vadd.f32 %v1818, %v1833
        %v1848 = vadd.f32 %v1823, %v1833
        %v1849 = vadd.f32 %v1828, %v1833
        %v1866 = vunpack.c.l.b16 %v427
        %v1867 = vunpack.c.l.b16 %v428
        %v1868 = vunpack.c.l.b16 %v429
        %v1869 = vunpack.c.l.b16 %v430
        %v1870 = vunpack.c.l.b16 %v431
        %v1871 = vunpack.c.l.b16 %v432
        %v1872 = vunpack.c.l.b16 %v433
        %v1873 = vunpack.c.l.b16 %v434
        %v1874 = vunpack.c.l.b16 %v435
        %v1875 = vunpack.c.l.b16 %v436
        %v1876 = vunpack.c.l.b16 %v437
        %v1877 = vunpack.c.l.b16 %v438
        %v1878 = vunpack.c.l.b16 %v439
        %v1879 = vunpack.c.l.b16 %v440
        %v1880 = vunpack.c.l.b16 %v441
        %v1881 = vunpack.c.l.b16 %v442
        %v1882 = vpack.c.b16 %v1867, %v1866
        %v1883 = vpack.c.b16 %v1869, %v1868
        %v1884 = vpack.c.b16 %v1871, %v1870
        %v1885 = vpack.c.b16 %v1873, %v1872
        %v1886 = vpack.c.b16 %v1875, %v1874
        %v1887 = vpack.c.b16 %v1877, %v1876
        %v1888 = vpack.c.b16 %v1879, %v1878
        %v1889 = vpack.c.b16 %v1881, %v1880
        %1898 = vmatprep.subr.bf16.mxu0 0
        %1899 = vmatpush1.bf16.xpose.msra.mxu0 %v1889
        %1900 = vmatprep.subr.bf16.mxu0 0
        %1901 = vmatpush1.bf16.xpose.msra.mxu0 %v1888
        %1902 = vmatprep.subr.bf16.mxu0 0
        %1903 = vmatpush1.bf16.xpose.msra.mxu0 %v1887
        %1904 = vmatprep.subr.bf16.mxu0 0
        %1905 = vmatpush1.bf16.xpose.msra.mxu0 %v1886
        %1906 = vmatprep.subr.bf16.mxu0 0
        %1907 = vmatpush1.bf16.xpose.msra.mxu0 %v1885
        %1908 = vmatprep.subr.bf16.mxu0 0
        %1909 = vmatpush1.bf16.xpose.msra.mxu0 %v1884
        %1910 = vmatprep.subr.bf16.mxu0 0
        %1911 = vmatpush1.bf16.xpose.msra.mxu0 %v1883
        %1912 = vmatprep.subr.bf16.mxu0 0
        %1913 = vmatpush1.bf16.xpose.msra.mxu0 %v1882
        %1914 = vmatprep.subr.bf16.mxu0 0
        %1915 = vmatpush2.bf16.xpose.msra.mxu0 0
        %1916 = vmatprep.subr.bf16.mxu0 0
        %1917 = vmatpush2.bf16.xpose.msra.mxu0 0
        %1918 = vmatprep.subr.bf16.mxu0 0
        %1919 = vmatpush2.bf16.xpose.msra.mxu0 0
        %1920 = vmatprep.subr.bf16.mxu0 0
        %1921 = vmatpush2.bf16.xpose.msra.mxu0 0
        %1922 = vmatprep.subr.bf16.mxu0 0
        %1923 = vmatpush2.bf16.xpose.msra.mxu0 0
        %1924 = vmatprep.subr.bf16.mxu0 0
        %1925 = vmatpush2.bf16.xpose.msra.mxu0 0
        %1926 = vmatprep.subr.bf16.mxu0 0
        %1927 = vmatpush2.bf16.xpose.msra.mxu0 0
        %1928 = vmatprep.subr.bf16.mxu0 0
        %1929 = vmatpush2.bf16.xpose.msra.mxu0 0
        %1930 = vmatprep.mubr.bf16.mxu0 0
        %1931 = vmatmul.mubr.bf16.gmra.mxu0 %v1331
        %v1932 = vpop.f32.mrf.mxu0
        %v1933 = vadd.f32 %v1834, %v1932
        %v1934 = vpop.f32.mrf.mxu0
        %v1935 = vpop.f32.mrf.mxu0
        %v1936 = vadd.f32 %v1835, %v1935
        %v1937 = vpop.f32.mrf.mxu0
        %1938 = vmatprep.mubr.bf16.mxu0 0
        %1939 = vmatmul.mubr.bf16.gmra.mxu0 %v1335
        %v1940 = vpop.f32.mrf.mxu0
        %v1941 = vadd.f32 %v1836, %v1940
        %v1942 = vpop.f32.mrf.mxu0
        %v1943 = vpop.f32.mrf.mxu0
        %v1944 = vadd.f32 %v1837, %v1943
        %v1945 = vpop.f32.mrf.mxu0
        %1946 = vmatprep.mubr.bf16.mxu0 0
        %1947 = vmatmul.mubr.bf16.gmra.mxu0 %v1339
        %v1948 = vpop.f32.mrf.mxu0
        %v1949 = vadd.f32 %v1838, %v1948
        %v1950 = vpop.f32.mrf.mxu0
        %v1951 = vpop.f32.mrf.mxu0
        %v1952 = vadd.f32 %v1839, %v1951
        %v1953 = vpop.f32.mrf.mxu0
        %1954 = vmatprep.mubr.bf16.mxu0 0
        %1955 = vmatmul.mubr.bf16.gmra.mxu0 %v1343
        %v1956 = vpop.f32.mrf.mxu0
        %v1957 = vadd.f32 %v1840, %v1956
        %v1958 = vpop.f32.mrf.mxu0
        %v1959 = vpop.f32.mrf.mxu0
        %v1960 = vadd.f32 %v1841, %v1959
        %v1961 = vpop.f32.mrf.mxu0
        %1962 = vmatprep.mubr.bf16.mxu0 0
        %1963 = vmatmul.mubr.bf16.gmra.mxu0 %v1347
        %v1964 = vpop.f32.mrf.mxu0
        %v1965 = vadd.f32 %v1842, %v1964
        %v1966 = vpop.f32.mrf.mxu0
        %v1967 = vpop.f32.mrf.mxu0
        %v1968 = vadd.f32 %v1843, %v1967
        %v1969 = vpop.f32.mrf.mxu0
        %1970 = vmatprep.mubr.bf16.mxu0 0
        %1971 = vmatmul.mubr.bf16.gmra.mxu0 %v1351
        %v1972 = vpop.f32.mrf.mxu0
        %v1973 = vadd.f32 %v1844, %v1972
        %v1974 = vpop.f32.mrf.mxu0
        %v1975 = vpop.f32.mrf.mxu0
        %v1976 = vadd.f32 %v1845, %v1975
        %v1977 = vpop.f32.mrf.mxu0
        %1978 = vmatprep.mubr.bf16.mxu0 0
        %1979 = vmatmul.mubr.bf16.gmra.mxu0 %v1355
        %v1980 = vpop.f32.mrf.mxu0
        %v1981 = vadd.f32 %v1846, %v1980
        %v1982 = vpop.f32.mrf.mxu0
        %v1983 = vpop.f32.mrf.mxu0
        %v1984 = vadd.f32 %v1847, %v1983
        %v1985 = vpop.f32.mrf.mxu0
        %1986 = vmatprep.mubr.bf16.mxu0 0
        %1987 = vmatmul.mubr.bf16.gmra.mxu0 %v1359
        %v1988 = vpop.f32.mrf.mxu0
        %v1989 = vadd.f32 %v1848, %v1988
        %v1990 = vpop.f32.mrf.mxu0
        %v1991 = vpop.f32.mrf.mxu0
        %v1992 = vadd.f32 %v1849, %v1991
        %v1993 = vpop.f32.mrf.mxu0
        %1994 = vdwg.mxu0
        %v1995 = vmul.f32 %v1933, %v1550
        %v1996 = vmul.f32 %v1936, %v1551
        %v1997 = vmul.f32 %v1941, %v1552
        %v1998 = vmul.f32 %v1944, %v1553
        %v1999 = vmul.f32 %v1949, %v1554
        %v2000 = vmul.f32 %v1952, %v1555
        %v2001 = vmul.f32 %v1957, %v1556
        %v2002 = vmul.f32 %v1960, %v1557
        %v2003 = vmul.f32 %v1965, %v1558
        %v2004 = vmul.f32 %v1968, %v1559
        %v2005 = vmul.f32 %v1973, %v1560
        %v2006 = vmul.f32 %v1976, %v1561
        %v2007 = vmul.f32 %v1981, %v1562
        %v2008 = vmul.f32 %v1984, %v1563
        %v2009 = vmul.f32 %v1989, %v1564
        %v2010 = vmul.f32 %v1992, %v1565
        %v2011 = vadd.f32 %v1995, %v1734
        %v2012 = vadd.f32 %v1996, %v1735
        %v2013 = vadd.f32 %v1997, %v1736
        %v2014 = vadd.f32 %v1998, %v1737
        %v2015 = vadd.f32 %v1999, %v1738
        %v2016 = vadd.f32 %v2000, %v1739
        %v2017 = vadd.f32 %v2001, %v1740
        %v2018 = vadd.f32 %v2002, %v1741
        %v2019 = vadd.f32 %v2003, %v1742
        %v2020 = vadd.f32 %v2004, %v1743
        %v2021 = vadd.f32 %v2005, %v1744
        %v2022 = vadd.f32 %v2006, %v1745
        %v2023 = vadd.f32 %v2007, %v1746
        %v2024 = vadd.f32 %v2008, %v1747
        %v2025 = vadd.f32 %v2009, %v1748
        %v2026 = vadd.f32 %v2010, %v1749
        %2027 = vst [vmem:[%s389] sm:$0xff] %v2011
        %2028 = vst [vmem:[%s389 + $0x8] sm:$0xff] %v2012
        %2029 = vst [vmem:[%s389 + $0x10] sm:$0xff] %v2013
        %2030 = vst [vmem:[%s389 + $0x18] sm:$0xff] %v2014
        %2031 = vst [vmem:[%s389 + $0x20] sm:$0xff] %v2015
        %2032 = vst [vmem:[%s389 + $0x28] sm:$0xff] %v2016
        %2033 = vst [vmem:[%s389 + $0x30] sm:$0xff] %v2017
        %2034 = vst [vmem:[%s389 + $0x38] sm:$0xff] %v2018
        %2035 = vst [vmem:[%s389 + $0x40] sm:$0xff] %v2019
        %2036 = vst [vmem:[%s389 + $0x48] sm:$0xff] %v2020
        %2037 = vst [vmem:[%s389 + $0x50] sm:$0xff] %v2021
        %2038 = vst [vmem:[%s389 + $0x58] sm:$0xff] %v2022
        %2039 = vst [vmem:[%s389 + $0x60] sm:$0xff] %v2023
        %2040 = vst [vmem:[%s389 + $0x68] sm:$0xff] %v2024
        %2041 = vst [vmem:[%s389 + $0x70] sm:$0xff] %v2025
        %2042 = vst [vmem:[%s389 + $0x78] sm:$0xff] %v2026
        %2043 = vset.pattern.permute.xlu0 1
        %2044 = vperm.xlu0 %2043, %v803
        %v2045 = vpop.permute.xlu0 %2044
        %2047 = vset.pattern.permute.xlu0 1
        %2048 = vperm.xlu0 %2047, %v806
        %v2049 = vpop.permute.xlu0 %2048
        %2051 = vset.pattern.permute.xlu0 1
        %2052 = vperm.xlu0 %2051, %v811
        %v2053 = vpop.permute.xlu0 %2052
        %2055 = vset.pattern.permute.xlu0 1
        %2056 = vperm.xlu0 %2055, %v814
        %v2057 = vpop.permute.xlu0 %2056
        %2059 = vset.pattern.permute.xlu0 1
        %2060 = vperm.xlu0 %2059, %v819
        %v2061 = vpop.permute.xlu0 %2060
        %2063 = vset.pattern.permute.xlu0 1
        %2064 = vperm.xlu0 %2063, %v822
        %v2065 = vpop.permute.xlu0 %2064
        %2067 = vset.pattern.permute.xlu0 1
        %2068 = vperm.xlu0 %2067, %v827
        %v2069 = vpop.permute.xlu0 %2068
        %2071 = vset.pattern.permute.xlu0 1
        %2072 = vperm.xlu0 %2071, %v830
        %v2073 = vpop.permute.xlu0 %2072
        %2075 = vset.pattern.permute.xlu0 1
        %2076 = vperm.xlu0 %2075, %v835
        %v2077 = vpop.permute.xlu0 %2076
        %2079 = vset.pattern.permute.xlu0 1
        %2080 = vperm.xlu0 %2079, %v838
        %v2081 = vpop.permute.xlu0 %2080
        %2083 = vset.pattern.permute.xlu0 1
        %2084 = vperm.xlu0 %2083, %v843
        %v2085 = vpop.permute.xlu0 %2084
        %2087 = vset.pattern.permute.xlu0 1
        %2088 = vperm.xlu0 %2087, %v846
        %v2089 = vpop.permute.xlu0 %2088
        %2091 = vset.pattern.permute.xlu0 1
        %2092 = vperm.xlu0 %2091, %v851
        %v2093 = vpop.permute.xlu0 %2092
        %2095 = vset.pattern.permute.xlu0 1
        %2096 = vperm.xlu0 %2095, %v854
        %v2097 = vpop.permute.xlu0 %2096
        %2099 = vset.pattern.permute.xlu0 1
        %2100 = vperm.xlu0 %2099, %v859
        %v2101 = vpop.permute.xlu0 %2100
        %2103 = vset.pattern.permute.xlu0 1
        %2104 = vperm.xlu0 %2103, %v862
        %v2105 = vpop.permute.xlu0 %2104
        %v2107 = vlaneseq
        %v2108 = vshrl.u32 %v2107, 7
        %v2109 = vsub.s32 1, %v2108
        %v2110 = vrot.slane %v644, %v2109
        %v2111 = vadd.f32 %v2045, %v2110
        %v2112 = vadd.f32 %v2049, %v2110
        %v2113 = vadd.f32 %v2053, %v2110
        %v2114 = vadd.f32 %v2057, %v2110
        %v2115 = vadd.f32 %v2061, %v2110
        %v2116 = vadd.f32 %v2065, %v2110
        %v2117 = vadd.f32 %v2069, %v2110
        %v2118 = vadd.f32 %v2073, %v2110
        %v2119 = vadd.f32 %v2077, %v2110
        %v2120 = vadd.f32 %v2081, %v2110
        %v2121 = vadd.f32 %v2085, %v2110
        %v2122 = vadd.f32 %v2089, %v2110
        %v2123 = vadd.f32 %v2093, %v2110
        %v2124 = vadd.f32 %v2097, %v2110
        %v2125 = vadd.f32 %v2101, %v2110
        %v2126 = vadd.f32 %v2105, %v2110
        %2127 = vmatprep.subr.bf16.mxu0 0
        %2128 = vmatpush1.bf16.xpose.msra.mxu0 %v1889
        %2129 = vmatprep.subr.bf16.mxu0 0
        %2130 = vmatpush1.bf16.xpose.msra.mxu0 %v1888
        %2131 = vmatprep.subr.bf16.mxu0 0
        %2132 = vmatpush1.bf16.xpose.msra.mxu0 %v1887
        %2133 = vmatprep.subr.bf16.mxu0 0
        %2134 = vmatpush1.bf16.xpose.msra.mxu0 %v1886
        %2135 = vmatprep.subr.bf16.mxu0 0
        %2136 = vmatpush1.bf16.xpose.msra.mxu0 %v1885
        %2137 = vmatprep.subr.bf16.mxu0 0
        %2138 = vmatpush1.bf16.xpose.msra.mxu0 %v1884
        %2139 = vmatprep.subr.bf16.mxu0 0
        %2140 = vmatpush1.bf16.xpose.msra.mxu0 %v1883
        %2141 = vmatprep.subr.bf16.mxu0 0
        %2142 = vmatpush1.bf16.xpose.msra.mxu0 %v1882
        %2143 = vmatprep.subr.bf16.mxu0 0
        %2144 = vmatpush2.bf16.xpose.msra.mxu0 0
        %2145 = vmatprep.subr.bf16.mxu0 0
        %2146 = vmatpush2.bf16.xpose.msra.mxu0 0
        %2147 = vmatprep.subr.bf16.mxu0 0
        %2148 = vmatpush2.bf16.xpose.msra.mxu0 0
        %2149 = vmatprep.subr.bf16.mxu0 0
        %2150 = vmatpush2.bf16.xpose.msra.mxu0 0
        %2151 = vmatprep.subr.bf16.mxu0 0
        %2152 = vmatpush2.bf16.xpose.msra.mxu0 0
        %2153 = vmatprep.subr.bf16.mxu0 0
        %2154 = vmatpush2.bf16.xpose.msra.mxu0 0
        %2155 = vmatprep.subr.bf16.mxu0 0
        %2156 = vmatpush2.bf16.xpose.msra.mxu0 0
        %2157 = vmatprep.subr.bf16.mxu0 0
        %2158 = vmatpush2.bf16.xpose.msra.mxu0 0
        %2159 = vmatprep.mubr.bf16.mxu0 0
        %2160 = vmatmul.mubr.bf16.gmra.mxu0 %v1332
        %v2161 = vpop.f32.mrf.mxu0
        %v2162 = vadd.f32 %v2111, %v2161
        %v2163 = vpop.f32.mrf.mxu0
        %v2164 = vpop.f32.mrf.mxu0
        %v2165 = vadd.f32 %v2112, %v2164
        %v2166 = vpop.f32.mrf.mxu0
        %2167 = vmatprep.mubr.bf16.mxu0 0
        %2168 = vmatmul.mubr.bf16.gmra.mxu0 %v1336
        %v2169 = vpop.f32.mrf.mxu0
        %v2170 = vadd.f32 %v2113, %v2169
        %v2171 = vpop.f32.mrf.mxu0
        %v2172 = vpop.f32.mrf.mxu0
        %v2173 = vadd.f32 %v2114, %v2172
        %v2174 = vpop.f32.mrf.mxu0
        %2175 = vmatprep.mubr.bf16.mxu0 0
        %2176 = vmatmul.mubr.bf16.gmra.mxu0 %v1340
        %v2177 = vpop.f32.mrf.mxu0
        %v2178 = vadd.f32 %v2115, %v2177
        %v2179 = vpop.f32.mrf.mxu0
        %v2180 = vpop.f32.mrf.mxu0
        %v2181 = vadd.f32 %v2116, %v2180
        %v2182 = vpop.f32.mrf.mxu0
        %2183 = vmatprep.mubr.bf16.mxu0 0
        %2184 = vmatmul.mubr.bf16.gmra.mxu0 %v1344
        %v2185 = vpop.f32.mrf.mxu0
        %v2186 = vadd.f32 %v2117, %v2185
        %v2187 = vpop.f32.mrf.mxu0
        %v2188 = vpop.f32.mrf.mxu0
        %v2189 = vadd.f32 %v2118, %v2188
        %v2190 = vpop.f32.mrf.mxu0
        %2191 = vmatprep.mubr.bf16.mxu0 0
        %2192 = vmatmul.mubr.bf16.gmra.mxu0 %v1348
        %v2193 = vpop.f32.mrf.mxu0
        %v2194 = vadd.f32 %v2119, %v2193
        %v2195 = vpop.f32.mrf.mxu0
        %v2196 = vpop.f32.mrf.mxu0
        %v2197 = vadd.f32 %v2120, %v2196
        %v2198 = vpop.f32.mrf.mxu0
        %2199 = vmatprep.mubr.bf16.mxu0 0
        %2200 = vmatmul.mubr.bf16.gmra.mxu0 %v1352
        %v2201 = vpop.f32.mrf.mxu0
        %v2202 = vadd.f32 %v2121, %v2201
        %v2203 = vpop.f32.mrf.mxu0
        %v2204 = vpop.f32.mrf.mxu0
        %v2205 = vadd.f32 %v2122, %v2204
        %v2206 = vpop.f32.mrf.mxu0
        %2207 = vmatprep.mubr.bf16.mxu0 0
        %2208 = vmatmul.mubr.bf16.gmra.mxu0 %v1356
        %v2209 = vpop.f32.mrf.mxu0
        %v2210 = vadd.f32 %v2123, %v2209
        %v2211 = vpop.f32.mrf.mxu0
        %v2212 = vpop.f32.mrf.mxu0
        %v2213 = vadd.f32 %v2124, %v2212
        %v2214 = vpop.f32.mrf.mxu0
        %2215 = vmatprep.mubr.bf16.mxu0 0
        %2216 = vmatmul.mubr.bf16.gmra.mxu0 %v1360
        %v2217 = vpop.f32.mrf.mxu0
        %v2218 = vadd.f32 %v2125, %v2217
        %v2219 = vpop.f32.mrf.mxu0
        %v2220 = vpop.f32.mrf.mxu0
        %v2221 = vadd.f32 %v2126, %v2220
        %v2222 = vpop.f32.mrf.mxu0
        %2223 = vdwg.mxu0
        %v2224 = vmul.f32 %v2162, %v1550
        %v2225 = vmul.f32 %v2165, %v1551
        %v2226 = vmul.f32 %v2170, %v1552
        %v2227 = vmul.f32 %v2173, %v1553
        %v2228 = vmul.f32 %v2178, %v1554
        %v2229 = vmul.f32 %v2181, %v1555
        %v2230 = vmul.f32 %v2186, %v1556
        %v2231 = vmul.f32 %v2189, %v1557
        %v2232 = vmul.f32 %v2194, %v1558
        %v2233 = vmul.f32 %v2197, %v1559
        %v2234 = vmul.f32 %v2202, %v1560
        %v2235 = vmul.f32 %v2205, %v1561
        %v2236 = vmul.f32 %v2210, %v1562
        %v2237 = vmul.f32 %v2213, %v1563
        %v2238 = vmul.f32 %v2218, %v1564
        %v2239 = vmul.f32 %v2221, %v1565
        %v2240 = vadd.f32 %v2224, %v1734
        %v2241 = vadd.f32 %v2225, %v1735
        %v2242 = vadd.f32 %v2226, %v1736
        %v2243 = vadd.f32 %v2227, %v1737
        %v2244 = vadd.f32 %v2228, %v1738
        %v2245 = vadd.f32 %v2229, %v1739
        %v2246 = vadd.f32 %v2230, %v1740
        %v2247 = vadd.f32 %v2231, %v1741
        %v2248 = vadd.f32 %v2232, %v1742
        %v2249 = vadd.f32 %v2233, %v1743
        %v2250 = vadd.f32 %v2234, %v1744
        %v2251 = vadd.f32 %v2235, %v1745
        %v2252 = vadd.f32 %v2236, %v1746
        %v2253 = vadd.f32 %v2237, %v1747
        %v2254 = vadd.f32 %v2238, %v1748
        %v2255 = vadd.f32 %v2239, %v1749
        %s2256 = scalar_lea.vmem %s389, 128 [#allocation5]
        %2257 = vst [vmem:[%s2256] sm:$0xff] %v2240
        %2258 = vst [vmem:[%s2256 + $0x8] sm:$0xff] %v2241
        %2259 = vst [vmem:[%s2256 + $0x10] sm:$0xff] %v2242
        %2260 = vst [vmem:[%s2256 + $0x18] sm:$0xff] %v2243
        %2261 = vst [vmem:[%s2256 + $0x20] sm:$0xff] %v2244
        %2262 = vst [vmem:[%s2256 + $0x28] sm:$0xff] %v2245
        %2263 = vst [vmem:[%s2256 + $0x30] sm:$0xff] %v2246
        %2264 = vst [vmem:[%s2256 + $0x38] sm:$0xff] %v2247
        %2265 = vst [vmem:[%s2256 + $0x40] sm:$0xff] %v2248
        %2266 = vst [vmem:[%s2256 + $0x48] sm:$0xff] %v2249
        %2267 = vst [vmem:[%s2256 + $0x50] sm:$0xff] %v2250
        %2268 = vst [vmem:[%s2256 + $0x58] sm:$0xff] %v2251
        %2269 = vst [vmem:[%s2256 + $0x60] sm:$0xff] %v2252
        %2270 = vst [vmem:[%s2256 + $0x68] sm:$0xff] %v2253
        %2271 = vst [vmem:[%s2256 + $0x70] sm:$0xff] %v2254
        %2272 = vst [vmem:[%s2256 + $0x78] sm:$0xff] %v2255
        %2273 = vset.pattern.permute.xlu0 2
        %2274 = vperm.xlu0 %2273, %v803
        %v2275 = vpop.permute.xlu0 %2274
        %2277 = vset.pattern.permute.xlu0 2
        %2278 = vperm.xlu0 %2277, %v806
        %v2279 = vpop.permute.xlu0 %2278
        %2281 = vset.pattern.permute.xlu0 2
        %2282 = vperm.xlu0 %2281, %v811
        %v2283 = vpop.permute.xlu0 %2282
        %2285 = vset.pattern.permute.xlu0 2
        %2286 = vperm.xlu0 %2285, %v814
        %v2287 = vpop.permute.xlu0 %2286
        %2289 = vset.pattern.permute.xlu0 2
        %2290 = vperm.xlu0 %2289, %v819
        %v2291 = vpop.permute.xlu0 %2290
        %2293 = vset.pattern.permute.xlu0 2
        %2294 = vperm.xlu0 %2293, %v822
        %v2295 = vpop.permute.xlu0 %2294
        %2297 = vset.pattern.permute.xlu0 2
        %2298 = vperm.xlu0 %2297, %v827
        %v2299 = vpop.permute.xlu0 %2298
        %2301 = vset.pattern.permute.xlu0 2
        %2302 = vperm.xlu0 %2301, %v830
        %v2303 = vpop.permute.xlu0 %2302
        %2305 = vset.pattern.permute.xlu0 2
        %2306 = vperm.xlu0 %2305, %v835
        %v2307 = vpop.permute.xlu0 %2306
        %2309 = vset.pattern.permute.xlu0 2
        %2310 = vperm.xlu0 %2309, %v838
        %v2311 = vpop.permute.xlu0 %2310
        %2313 = vset.pattern.permute.xlu0 2
        %2314 = vperm.xlu0 %2313, %v843
        %v2315 = vpop.permute.xlu0 %2314
        %2317 = vset.pattern.permute.xlu0 2
        %2318 = vperm.xlu0 %2317, %v846
        %v2319 = vpop.permute.xlu0 %2318
        %2321 = vset.pattern.permute.xlu0 2
        %2322 = vperm.xlu0 %2321, %v851
        %v2323 = vpop.permute.xlu0 %2322
        %2325 = vset.pattern.permute.xlu0 2
        %2326 = vperm.xlu0 %2325, %v854
        %v2327 = vpop.permute.xlu0 %2326
        %2329 = vset.pattern.permute.xlu0 2
        %2330 = vperm.xlu0 %2329, %v859
        %v2331 = vpop.permute.xlu0 %2330
        %2333 = vset.pattern.permute.xlu0 2
        %2334 = vperm.xlu0 %2333, %v862
        %v2335 = vpop.permute.xlu0 %2334
        %v2337 = vlaneseq
        %v2338 = vshrl.u32 %v2337, 7
        %v2339 = vsub.s32 2, %v2338
        %v2340 = vrot.slane %v644, %v2339
        %v2341 = vadd.f32 %v2275, %v2340
        %v2342 = vadd.f32 %v2279, %v2340
        %v2343 = vadd.f32 %v2283, %v2340
        %v2344 = vadd.f32 %v2287, %v2340
        %v2345 = vadd.f32 %v2291, %v2340
        %v2346 = vadd.f32 %v2295, %v2340
        %v2347 = vadd.f32 %v2299, %v2340
        %v2348 = vadd.f32 %v2303, %v2340
        %v2349 = vadd.f32 %v2307, %v2340
        %v2350 = vadd.f32 %v2311, %v2340
        %v2351 = vadd.f32 %v2315, %v2340
        %v2352 = vadd.f32 %v2319, %v2340
        %v2353 = vadd.f32 %v2323, %v2340
        %v2354 = vadd.f32 %v2327, %v2340
        %v2355 = vadd.f32 %v2331, %v2340
        %v2356 = vadd.f32 %v2335, %v2340
        %2357 = vmatprep.subr.bf16.mxu0 0
        %2358 = vmatpush1.bf16.xpose.msra.mxu0 %v1889
        %2359 = vmatprep.subr.bf16.mxu0 0
        %2360 = vmatpush1.bf16.xpose.msra.mxu0 %v1888
        %2361 = vmatprep.subr.bf16.mxu0 0
        %2362 = vmatpush1.bf16.xpose.msra.mxu0 %v1887
        %2363 = vmatprep.subr.bf16.mxu0 0
        %2364 = vmatpush1.bf16.xpose.msra.mxu0 %v1886
        %2365 = vmatprep.subr.bf16.mxu0 0
        %2366 = vmatpush1.bf16.xpose.msra.mxu0 %v1885
        %2367 = vmatprep.subr.bf16.mxu0 0
        %2368 = vmatpush1.bf16.xpose.msra.mxu0 %v1884
        %2369 = vmatprep.subr.bf16.mxu0 0
        %2370 = vmatpush1.bf16.xpose.msra.mxu0 %v1883
        %2371 = vmatprep.subr.bf16.mxu0 0
        %2372 = vmatpush1.bf16.xpose.msra.mxu0 %v1882
        %2373 = vmatprep.subr.bf16.mxu0 0
        %2374 = vmatpush2.bf16.xpose.msra.mxu0 0
        %2375 = vmatprep.subr.bf16.mxu0 0
        %2376 = vmatpush2.bf16.xpose.msra.mxu0 0
        %2377 = vmatprep.subr.bf16.mxu0 0
        %2378 = vmatpush2.bf16.xpose.msra.mxu0 0
        %2379 = vmatprep.subr.bf16.mxu0 0
        %2380 = vmatpush2.bf16.xpose.msra.mxu0 0
        %2381 = vmatprep.subr.bf16.mxu0 0
        %2382 = vmatpush2.bf16.xpose.msra.mxu0 0
        %2383 = vmatprep.subr.bf16.mxu0 0
        %2384 = vmatpush2.bf16.xpose.msra.mxu0 0
        %2385 = vmatprep.subr.bf16.mxu0 0
        %2386 = vmatpush2.bf16.xpose.msra.mxu0 0
        %2387 = vmatprep.subr.bf16.mxu0 0
        %2388 = vmatpush2.bf16.xpose.msra.mxu0 0
        %2389 = vmatprep.mubr.bf16.mxu0 0
        %2390 = vmatmul.mubr.bf16.gmra.mxu0 %v1333
        %v2391 = vpop.f32.mrf.mxu0
        %v2392 = vadd.f32 %v2341, %v2391
        %v2393 = vpop.f32.mrf.mxu0
        %v2394 = vpop.f32.mrf.mxu0
        %v2395 = vadd.f32 %v2342, %v2394
        %v2396 = vpop.f32.mrf.mxu0
        %2397 = vmatprep.mubr.bf16.mxu0 0
        %2398 = vmatmul.mubr.bf16.gmra.mxu0 %v1337
        %v2399 = vpop.f32.mrf.mxu0
        %v2400 = vadd.f32 %v2343, %v2399
        %v2401 = vpop.f32.mrf.mxu0
        %v2402 = vpop.f32.mrf.mxu0
        %v2403 = vadd.f32 %v2344, %v2402
        %v2404 = vpop.f32.mrf.mxu0
        %2405 = vmatprep.mubr.bf16.mxu0 0
        %2406 = vmatmul.mubr.bf16.gmra.mxu0 %v1341
        %v2407 = vpop.f32.mrf.mxu0
        %v2408 = vadd.f32 %v2345, %v2407
        %v2409 = vpop.f32.mrf.mxu0
        %v2410 = vpop.f32.mrf.mxu0
        %v2411 = vadd.f32 %v2346, %v2410
        %v2412 = vpop.f32.mrf.mxu0
        %2413 = vmatprep.mubr.bf16.mxu0 0
        %2414 = vmatmul.mubr.bf16.gmra.mxu0 %v1345
        %v2415 = vpop.f32.mrf.mxu0
        %v2416 = vadd.f32 %v2347, %v2415
        %v2417 = vpop.f32.mrf.mxu0
        %v2418 = vpop.f32.mrf.mxu0
        %v2419 = vadd.f32 %v2348, %v2418
        %v2420 = vpop.f32.mrf.mxu0
        %2421 = vmatprep.mubr.bf16.mxu0 0
        %2422 = vmatmul.mubr.bf16.gmra.mxu0 %v1349
        %v2423 = vpop.f32.mrf.mxu0
        %v2424 = vadd.f32 %v2349, %v2423
        %v2425 = vpop.f32.mrf.mxu0
        %v2426 = vpop.f32.mrf.mxu0
        %v2427 = vadd.f32 %v2350, %v2426
        %v2428 = vpop.f32.mrf.mxu0
        %2429 = vmatprep.mubr.bf16.mxu0 0
        %2430 = vmatmul.mubr.bf16.gmra.mxu0 %v1353
        %v2431 = vpop.f32.mrf.mxu0
        %v2432 = vadd.f32 %v2351, %v2431
        %v2433 = vpop.f32.mrf.mxu0
        %v2434 = vpop.f32.mrf.mxu0
        %v2435 = vadd.f32 %v2352, %v2434
        %v2436 = vpop.f32.mrf.mxu0
        %2437 = vmatprep.mubr.bf16.mxu0 0
        %2438 = vmatmul.mubr.bf16.gmra.mxu0 %v1357
        %v2439 = vpop.f32.mrf.mxu0
        %v2440 = vadd.f32 %v2353, %v2439
        %v2441 = vpop.f32.mrf.mxu0
        %v2442 = vpop.f32.mrf.mxu0
        %v2443 = vadd.f32 %v2354, %v2442
        %v2444 = vpop.f32.mrf.mxu0
        %2445 = vmatprep.mubr.bf16.mxu0 0
        %2446 = vmatmul.mubr.bf16.gmra.mxu0 %v1361
        %v2447 = vpop.f32.mrf.mxu0
        %v2448 = vadd.f32 %v2355, %v2447
        %v2449 = vpop.f32.mrf.mxu0
        %v2450 = vpop.f32.mrf.mxu0
        %v2451 = vadd.f32 %v2356, %v2450
        %v2452 = vpop.f32.mrf.mxu0
        %2453 = vdwg.mxu0
        %v2454 = vmul.f32 %v2392, %v1550
        %v2455 = vmul.f32 %v2395, %v1551
        %v2456 = vmul.f32 %v2400, %v1552
        %v2457 = vmul.f32 %v2403, %v1553
        %v2458 = vmul.f32 %v2408, %v1554
        %v2459 = vmul.f32 %v2411, %v1555
        %v2460 = vmul.f32 %v2416, %v1556
        %v2461 = vmul.f32 %v2419, %v1557
        %v2462 = vmul.f32 %v2424, %v1558
        %v2463 = vmul.f32 %v2427, %v1559
        %v2464 = vmul.f32 %v2432, %v1560
        %v2465 = vmul.f32 %v2435, %v1561
        %v2466 = vmul.f32 %v2440, %v1562
        %v2467 = vmul.f32 %v2443, %v1563
        %v2468 = vmul.f32 %v2448, %v1564
        %v2469 = vmul.f32 %v2451, %v1565
        %v2470 = vadd.f32 %v2454, %v1734
        %v2471 = vadd.f32 %v2455, %v1735
        %v2472 = vadd.f32 %v2456, %v1736
        %v2473 = vadd.f32 %v2457, %v1737
        %v2474 = vadd.f32 %v2458, %v1738
        %v2475 = vadd.f32 %v2459, %v1739
        %v2476 = vadd.f32 %v2460, %v1740
        %v2477 = vadd.f32 %v2461, %v1741
        %v2478 = vadd.f32 %v2462, %v1742
        %v2479 = vadd.f32 %v2463, %v1743
        %v2480 = vadd.f32 %v2464, %v1744
        %v2481 = vadd.f32 %v2465, %v1745
        %v2482 = vadd.f32 %v2466, %v1746
        %v2483 = vadd.f32 %v2467, %v1747
        %v2484 = vadd.f32 %v2468, %v1748
        %v2485 = vadd.f32 %v2469, %v1749
        %s2486 = scalar_lea.vmem %s389, 256 [#allocation5]
        %2487 = vst [vmem:[%s2486] sm:$0xff] %v2470
        %2488 = vst [vmem:[%s2486 + $0x8] sm:$0xff] %v2471
        %2489 = vst [vmem:[%s2486 + $0x10] sm:$0xff] %v2472
        %2490 = vst [vmem:[%s2486 + $0x18] sm:$0xff] %v2473
        %2491 = vst [vmem:[%s2486 + $0x20] sm:$0xff] %v2474
        %2492 = vst [vmem:[%s2486 + $0x28] sm:$0xff] %v2475
        %2493 = vst [vmem:[%s2486 + $0x30] sm:$0xff] %v2476
        %2494 = vst [vmem:[%s2486 + $0x38] sm:$0xff] %v2477
        %2495 = vst [vmem:[%s2486 + $0x40] sm:$0xff] %v2478
        %2496 = vst [vmem:[%s2486 + $0x48] sm:$0xff] %v2479
        %2497 = vst [vmem:[%s2486 + $0x50] sm:$0xff] %v2480
        %2498 = vst [vmem:[%s2486 + $0x58] sm:$0xff] %v2481
        %2499 = vst [vmem:[%s2486 + $0x60] sm:$0xff] %v2482
        %2500 = vst [vmem:[%s2486 + $0x68] sm:$0xff] %v2483
        %2501 = vst [vmem:[%s2486 + $0x70] sm:$0xff] %v2484
        %2502 = vst [vmem:[%s2486 + $0x78] sm:$0xff] %v2485
        %2503 = vset.pattern.permute.xlu0 3
        %2504 = vperm.xlu0 %2503, %v803
        %v2505 = vpop.permute.xlu0 %2504
        %2507 = vset.pattern.permute.xlu0 3
        %2508 = vperm.xlu0 %2507, %v806
        %v2509 = vpop.permute.xlu0 %2508
        %2511 = vset.pattern.permute.xlu0 3
        %2512 = vperm.xlu0 %2511, %v811
        %v2513 = vpop.permute.xlu0 %2512
        %2515 = vset.pattern.permute.xlu0 3
        %2516 = vperm.xlu0 %2515, %v814
        %v2517 = vpop.permute.xlu0 %2516
        %2519 = vset.pattern.permute.xlu0 3
        %2520 = vperm.xlu0 %2519, %v819
        %v2521 = vpop.permute.xlu0 %2520
        %2523 = vset.pattern.permute.xlu0 3
        %2524 = vperm.xlu0 %2523, %v822
        %v2525 = vpop.permute.xlu0 %2524
        %2527 = vset.pattern.permute.xlu0 3
        %2528 = vperm.xlu0 %2527, %v827
        %v2529 = vpop.permute.xlu0 %2528
        %2531 = vset.pattern.permute.xlu0 3
        %2532 = vperm.xlu0 %2531, %v830
        %v2533 = vpop.permute.xlu0 %2532
        %2535 = vset.pattern.permute.xlu0 3
        %2536 = vperm.xlu0 %2535, %v835
        %v2537 = vpop.permute.xlu0 %2536
        %2539 = vset.pattern.permute.xlu0 3
        %2540 = vperm.xlu0 %2539, %v838
        %v2541 = vpop.permute.xlu0 %2540
        %2543 = vset.pattern.permute.xlu0 3
        %2544 = vperm.xlu0 %2543, %v843
        %v2545 = vpop.permute.xlu0 %2544
        %2547 = vset.pattern.permute.xlu0 3
        %2548 = vperm.xlu0 %2547, %v846
        %v2549 = vpop.permute.xlu0 %2548
        %2551 = vset.pattern.permute.xlu0 3
        %2552 = vperm.xlu0 %2551, %v851
        %v2553 = vpop.permute.xlu0 %2552
        %2555 = vset.pattern.permute.xlu0 3
        %2556 = vperm.xlu0 %2555, %v854
        %v2557 = vpop.permute.xlu0 %2556
        %2559 = vset.pattern.permute.xlu0 3
        %2560 = vperm.xlu0 %2559, %v859
        %v2561 = vpop.permute.xlu0 %2560
        %2563 = vset.pattern.permute.xlu0 3
        %2564 = vperm.xlu0 %2563, %v862
        %v2565 = vpop.permute.xlu0 %2564
        %v2567 = vlaneseq
        %v2568 = vshrl.u32 %v2567, 7
        %v2569 = vsub.s32 3, %v2568
        %v2570 = vrot.slane %v644, %v2569
        %v2571 = vadd.f32 %v2505, %v2570
        %v2572 = vadd.f32 %v2509, %v2570
        %v2573 = vadd.f32 %v2513, %v2570
        %v2574 = vadd.f32 %v2517, %v2570
        %v2575 = vadd.f32 %v2521, %v2570
        %v2576 = vadd.f32 %v2525, %v2570
        %v2577 = vadd.f32 %v2529, %v2570
        %v2578 = vadd.f32 %v2533, %v2570
        %v2579 = vadd.f32 %v2537, %v2570
        %v2580 = vadd.f32 %v2541, %v2570
        %v2581 = vadd.f32 %v2545, %v2570
        %v2582 = vadd.f32 %v2549, %v2570
        %v2583 = vadd.f32 %v2553, %v2570
        %v2584 = vadd.f32 %v2557, %v2570
        %v2585 = vadd.f32 %v2561, %v2570
        %v2586 = vadd.f32 %v2565, %v2570
        %2587 = vmatprep.subr.bf16.mxu0 0
        %2588 = vmatpush1.bf16.xpose.msra.mxu0 %v1889
        %2589 = vmatprep.subr.bf16.mxu0 0
        %2590 = vmatpush1.bf16.xpose.msra.mxu0 %v1888
        %2591 = vmatprep.subr.bf16.mxu0 0
        %2592 = vmatpush1.bf16.xpose.msra.mxu0 %v1887
        %2593 = vmatprep.subr.bf16.mxu0 0
        %2594 = vmatpush1.bf16.xpose.msra.mxu0 %v1886
        %2595 = vmatprep.subr.bf16.mxu0 0
        %2596 = vmatpush1.bf16.xpose.msra.mxu0 %v1885
        %2597 = vmatprep.subr.bf16.mxu0 0
        %2598 = vmatpush1.bf16.xpose.msra.mxu0 %v1884
        %2599 = vmatprep.subr.bf16.mxu0 0
        %2600 = vmatpush1.bf16.xpose.msra.mxu0 %v1883
        %2601 = vmatprep.subr.bf16.mxu0 0
        %2602 = vmatpush1.bf16.xpose.msra.mxu0 %v1882
        %2603 = vmatprep.subr.bf16.mxu0 0
        %2604 = vmatpush2.bf16.xpose.msra.mxu0 0
        %2605 = vmatprep.subr.bf16.mxu0 0
        %2606 = vmatpush2.bf16.xpose.msra.mxu0 0
        %2607 = vmatprep.subr.bf16.mxu0 0
        %2608 = vmatpush2.bf16.xpose.msra.mxu0 0
        %2609 = vmatprep.subr.bf16.mxu0 0
        %2610 = vmatpush2.bf16.xpose.msra.mxu0 0
        %2611 = vmatprep.subr.bf16.mxu0 0
        %2612 = vmatpush2.bf16.xpose.msra.mxu0 0
        %2613 = vmatprep.subr.bf16.mxu0 0
        %2614 = vmatpush2.bf16.xpose.msra.mxu0 0
        %2615 = vmatprep.subr.bf16.mxu0 0
        %2616 = vmatpush2.bf16.xpose.msra.mxu0 0
        %2617 = vmatprep.subr.bf16.mxu0 0
        %2618 = vmatpush2.bf16.xpose.msra.mxu0 0
        %2619 = vmatprep.mubr.bf16.mxu0 0
        %2620 = vmatmul.mubr.bf16.gmra.mxu0 %v1334
        %v2621 = vpop.f32.mrf.mxu0
        %v2622 = vadd.f32 %v2571, %v2621
        %v2623 = vpop.f32.mrf.mxu0
        %v2624 = vpop.f32.mrf.mxu0
        %v2625 = vadd.f32 %v2572, %v2624
        %v2626 = vpop.f32.mrf.mxu0
        %2627 = vmatprep.mubr.bf16.mxu0 0
        %2628 = vmatmul.mubr.bf16.gmra.mxu0 %v1338
        %v2629 = vpop.f32.mrf.mxu0
        %v2630 = vadd.f32 %v2573, %v2629
        %v2631 = vpop.f32.mrf.mxu0
        %v2632 = vpop.f32.mrf.mxu0
        %v2633 = vadd.f32 %v2574, %v2632
        %v2634 = vpop.f32.mrf.mxu0
        %2635 = vmatprep.mubr.bf16.mxu0 0
        %2636 = vmatmul.mubr.bf16.gmra.mxu0 %v1342
        %v2637 = vpop.f32.mrf.mxu0
        %v2638 = vadd.f32 %v2575, %v2637
        %v2639 = vpop.f32.mrf.mxu0
        %v2640 = vpop.f32.mrf.mxu0
        %v2641 = vadd.f32 %v2576, %v2640
        %v2642 = vpop.f32.mrf.mxu0
        %2643 = vmatprep.mubr.bf16.mxu0 0
        %2644 = vmatmul.mubr.bf16.gmra.mxu0 %v1346
        %v2645 = vpop.f32.mrf.mxu0
        %v2646 = vadd.f32 %v2577, %v2645
        %v2647 = vpop.f32.mrf.mxu0
        %v2648 = vpop.f32.mrf.mxu0
        %v2649 = vadd.f32 %v2578, %v2648
        %v2650 = vpop.f32.mrf.mxu0
        %2651 = vmatprep.mubr.bf16.mxu0 0
        %2652 = vmatmul.mubr.bf16.gmra.mxu0 %v1350
        %v2653 = vpop.f32.mrf.mxu0
        %v2654 = vadd.f32 %v2579, %v2653
        %v2655 = vpop.f32.mrf.mxu0
        %v2656 = vpop.f32.mrf.mxu0
        %v2657 = vadd.f32 %v2580, %v2656
        %v2658 = vpop.f32.mrf.mxu0
        %2659 = vmatprep.mubr.bf16.mxu0 0
        %2660 = vmatmul.mubr.bf16.gmra.mxu0 %v1354
        %v2661 = vpop.f32.mrf.mxu0
        %v2662 = vadd.f32 %v2581, %v2661
        %v2663 = vpop.f32.mrf.mxu0
        %v2664 = vpop.f32.mrf.mxu0
        %v2665 = vadd.f32 %v2582, %v2664
        %v2666 = vpop.f32.mrf.mxu0
        %2667 = vmatprep.mubr.bf16.mxu0 0
        %2668 = vmatmul.mubr.bf16.gmra.mxu0 %v1358
        %v2669 = vpop.f32.mrf.mxu0
        %v2670 = vadd.f32 %v2583, %v2669
        %v2671 = vpop.f32.mrf.mxu0
        %v2672 = vpop.f32.mrf.mxu0
        %v2673 = vadd.f32 %v2584, %v2672
        %v2674 = vpop.f32.mrf.mxu0
        %2675 = vmatprep.mubr.bf16.mxu0 0
        %2676 = vmatmul.mubr.bf16.gmra.mxu0 %v1362
        %v2677 = vpop.f32.mrf.mxu0
        %v2678 = vadd.f32 %v2585, %v2677
        %v2679 = vpop.f32.mrf.mxu0
        %v2680 = vpop.f32.mrf.mxu0
        %v2681 = vadd.f32 %v2586, %v2680
        %v2682 = vpop.f32.mrf.mxu0
        %2683 = vdwg.mxu0
        %v2684 = vmul.f32 %v2622, %v1550
        %v2685 = vmul.f32 %v2625, %v1551
        %v2686 = vmul.f32 %v2630, %v1552
        %v2687 = vmul.f32 %v2633, %v1553
        %v2688 = vmul.f32 %v2638, %v1554
        %v2689 = vmul.f32 %v2641, %v1555
        %v2690 = vmul.f32 %v2646, %v1556
        %v2691 = vmul.f32 %v2649, %v1557
        %v2692 = vmul.f32 %v2654, %v1558
        %v2693 = vmul.f32 %v2657, %v1559
        %v2694 = vmul.f32 %v2662, %v1560
        %v2695 = vmul.f32 %v2665, %v1561
        %v2696 = vmul.f32 %v2670, %v1562
        %v2697 = vmul.f32 %v2673, %v1563
        %v2698 = vmul.f32 %v2678, %v1564
        %v2699 = vmul.f32 %v2681, %v1565
        %v2700 = vadd.f32 %v2684, %v1734
        %v2701 = vadd.f32 %v2685, %v1735
        %v2702 = vadd.f32 %v2686, %v1736
        %v2703 = vadd.f32 %v2687, %v1737
        %v2704 = vadd.f32 %v2688, %v1738
        %v2705 = vadd.f32 %v2689, %v1739
        %v2706 = vadd.f32 %v2690, %v1740
        %v2707 = vadd.f32 %v2691, %v1741
        %v2708 = vadd.f32 %v2692, %v1742
        %v2709 = vadd.f32 %v2693, %v1743
        %v2710 = vadd.f32 %v2694, %v1744
        %v2711 = vadd.f32 %v2695, %v1745
        %v2712 = vadd.f32 %v2696, %v1746
        %v2713 = vadd.f32 %v2697, %v1747
        %v2714 = vadd.f32 %v2698, %v1748
        %v2715 = vadd.f32 %v2699, %v1749
        %s2716 = scalar_lea.vmem %s389, 384 [#allocation5]
        %2717 = vst [vmem:[%s2716] sm:$0xff] %v2700
        %2718 = vst [vmem:[%s2716 + $0x8] sm:$0xff] %v2701
        %2719 = vst [vmem:[%s2716 + $0x10] sm:$0xff] %v2702
        %2720 = vst [vmem:[%s2716 + $0x18] sm:$0xff] %v2703
        %2721 = vst [vmem:[%s2716 + $0x20] sm:$0xff] %v2704
        %2722 = vst [vmem:[%s2716 + $0x28] sm:$0xff] %v2705
        %2723 = vst [vmem:[%s2716 + $0x30] sm:$0xff] %v2706
        %2724 = vst [vmem:[%s2716 + $0x38] sm:$0xff] %v2707
        %2725 = vst [vmem:[%s2716 + $0x40] sm:$0xff] %v2708
        %2726 = vst [vmem:[%s2716 + $0x48] sm:$0xff] %v2709
        %2727 = vst [vmem:[%s2716 + $0x50] sm:$0xff] %v2710
        %2728 = vst [vmem:[%s2716 + $0x58] sm:$0xff] %v2711
        %2729 = vst [vmem:[%s2716 + $0x60] sm:$0xff] %v2712
        %2730 = vst [vmem:[%s2716 + $0x68] sm:$0xff] %v2713
        %2731 = vst [vmem:[%s2716 + $0x70] sm:$0xff] %v2714
        %2732 = vst [vmem:[%s2716 + $0x78] sm:$0xff] %v2715
        %s2733 = sand.u32 %s237, 1
        %s2734 = scalar_lea.sflag [#allocation4], %s2733
        %s2735 = sand.u32 %s237, 1
        %s2736 = smul.addr %s2735, 512
        %s2737 = scalar_lea.vmem [#allocation5], %s2736
        // Predicated region
        $region57: #{tpu_custom_call.1} parent=51 // pred_check
          %p2738 = pneg %p247
        $region58: #{tpu_custom_call.1} parent=51 // pred_check_branch
          %2740 = sbr.rel (%p2738) target = $region60
        $region59: #{tpu_custom_call.1} parent=51 // pred_region
          %s2741 = smul.u32 16, %s30
          %s2743 = ssub.s32 8192, 8192
          %2744 = vsyncadd %s2734, %s2743
          %s2745 = smul.addr %s29, 64
          %s2746 = sadd.s32 %s2741, %s2745
          %s2747 = smul.addr %s2746, 128
          %s2748 = scalar_lea.hbm %s8, %s2747
          %s2749 = sshll.u32 %s2737, 4
          %s2750 = int_to_ptr.vmem [resolvable:$true] %s2749
          %2755 = dma.vmem_to_hbm [thread:$0]  %s2750, 8192, %s2748, %s2734, 128, 128, 8
        $region60: #{tpu_custom_call.1} parent=51 // pred_fallthru
          _
      $region52: #{tpu_custom_call.1} parent=5 // pred_fallthru
        _
      %p2756 = scmp.le.s32.totalorder 2, %s20
      // Predicated region
      $region61: #{tpu_custom_call.1} parent=5 // pred_check
        %p2757 = pneg %p2756
      $region62: #{tpu_custom_call.1} parent=5 // pred_check_branch
        %2759 = sbr.rel (%p2757) target = $region64
      $region63: #{tpu_custom_call.1} parent=5 // pred_region
        %s2760 = ssub.s32 %s20, 2
        // Predicated region
        $region65: #{tpu_custom_call.1} parent=63 // pred_check
          %p2761 = pneg %p253
        $region66: #{tpu_custom_call.1} parent=63 // pred_check_branch
          %2763 = sbr.rel (%p2761) target = $region68
        $region67: #{tpu_custom_call.1} parent=63 // pred_region
          %s2764 = sand.u32 %s238, 1
          %s2765 = scalar_lea.sflag [#allocation4], %s2764
          %s2766 = sand.u32 %s238, 1
          %s2767 = smul.addr %s2766, 512
          %s2768 = scalar_lea.vmem [#allocation5], %s2767
          %2769 = dma.done %s2765, 8192
        $region68: #{tpu_custom_call.1} parent=63 // pred_fallthru
          _
      $region64: #{tpu_custom_call.1} parent=5 // pred_fallthru
        _
    $region6: #{tpu_custom_call.1} parent=1 // loop_footer
      %s24 = sadd.s32 1, %s20
    $region7: #{tpu_custom_call.1} parent=1 // loop_footer_branch
      %19 = sbr.rel target = $region3
    $region8: #{tpu_custom_call.1} parent=1 // loop_exit
      _
    %2770 = vsyncpa [#allocation3], 1
    %s2771 = scalar_lea.sflag [#allocation3], 1
    %2772 = vsyncpa %s2771, 1
    %2773 = vsyncpa [#allocation4], 1
    %s2774 = scalar_lea.sflag [#allocation4], 1
    %2775 = vsyncpa %s2774, 1

</llo_original>
